<compile_context>
chip_gen: v7x
topology: tpu7x:2x2x1
jax: 0.10.0
libtpu: 0.0.40
codegen_flags: <defaults>
</compile_context>

<pallas_src>
import math
from functools import partial

import jax
import jax.numpy as jnp
from jax import lax
from jax.experimental import pallas as pl
from jax.experimental.pallas import tpu as pltpu

SQRT2 = math.sqrt(2.0)


def _ada_block_kernel(dilation, C, E, T, use_norm, eps, mm_dtype,
                      x_ref, c1_ref, c2_ref, diff_ref,
                      w_diff_ref, b_diff_ref,
                      w_dil_ref, b_dil_ref,
                      w_cond_ref, b_cond_ref,
                      w_mid_ref, b_mid_ref,
                      w_ada_ref, b_ada_ref,
                      w_out_ref, b_out_ref,
                      g1w_ref, g1b_ref, g2w_ref, g2b_ref,
                      res_ref, skip_ref):
    f32 = jnp.float32
    d = dilation

    x = x_ref[0].astype(f32)        # (C, T)   residual activations, channels-first
    c1 = c1_ref[0]                  # (C, T)   adaLN conditioning
    c2 = c2_ref[0]                  # (E, T)   additive conditioning
    dvec = diff_ref[0]              # (C, 1)   diffusion embedding (column)

    # diffusion_projection (nn.Linear) -> per-channel column, broadcast over time
    dstep = jnp.dot(w_diff_ref[...], dvec.astype(mm_dtype),
                    preferred_element_type=f32) + b_diff_ref[...]          # (C, 1)
    y = (x + dstep).astype(mm_dtype)                                       # (C, T)

    # dilated_conv (k=3, padding=dilation, dilation=dilation): build a (3C, T)
    # tap slab with XLU lane rotations + boundary masks, then ONE K=3C matmul.
    col = lax.broadcasted_iota(jnp.int32, (1, T), 1)
    zero = jnp.zeros_like(y)
    y_prev = jnp.where(col >= d, pltpu.roll(y, d, axis=1), zero)           # y[:, t-d]
    y_next = jnp.where(col < T - d, pltpu.roll(y, T - d, axis=1), zero)    # y[:, t+d]
    slab = jnp.concatenate([y_prev, y, y_next], axis=0)                    # (3C, T)
    dc = jnp.dot(w_dil_ref[...], slab,
                 preferred_element_type=f32) + b_dil_ref[...]              # (2C, T)

    if use_norm:  # GroupNorm(groups=2C) == per-channel norm over T
        mu = jnp.mean(dc, axis=1, keepdims=True)
        var = jnp.mean(jnp.square(dc - mu), axis=1, keepdims=True)
        dc = (dc - mu) * lax.rsqrt(var + eps) * g1w_ref[...] + g1b_ref[...]

    # add_cond_projection (1x1 conv)
    cond_p = jnp.dot(w_cond_ref[...], c2.astype(mm_dtype),
                     preferred_element_type=f32) + b_cond_ref[...]         # (2C, T)
    z = dc + cond_p

    # mid_projection (1x1 conv) + optional GroupNorm
    mid = jnp.dot(w_mid_ref[...], z.astype(mm_dtype),
                  preferred_element_type=f32) + b_mid_ref[...]             # (2C, T)
    if use_norm:
        mu = jnp.mean(mid, axis=1, keepdims=True)
        var = jnp.mean(jnp.square(mid - mu), axis=1, keepdims=True)
        mid = (mid - mu) * lax.rsqrt(var + eps) * g2w_ref[...] + g2b_ref[...]

    # ada_modulation: SiLU -> 1x1 conv (C -> 4C); chunk into shift/scale
    ada = jnp.dot(w_ada_ref[...], jax.nn.silu(c1.astype(f32)).astype(mm_dtype),
                  preferred_element_type=f32) + b_ada_ref[...]             # (4C, T)
    shift_msa = ada[:2 * C, :]
    scale_msa = ada[2 * C:, :]
    m = mid * (1.0 + scale_msa) + shift_msa                                # (2C, T)

    # gated activation (sublane slices at multiples of 8 -> aligned views)
    gate = m[:C, :]
    filt = m[C:, :]
    act = jax.nn.sigmoid(gate) * jnp.tanh(filt)                            # (C, T)

    # output_projection (1x1 conv)
    o = jnp.dot(w_out_ref[...], act.astype(mm_dtype),
                preferred_element_type=f32) + b_out_ref[...]               # (2C, T)

    # lane-dense stores (last dim = T)
    res_ref[0] = ((x + o[:C, :]) * (1.0 / SQRT2)).astype(res_ref.dtype)
    skip_ref[0] = o[C:, :].astype(skip_ref.dtype)


def prepare_params(params):
    """Repack torch-style weights ONCE (outside the per-call path)."""
    w = params["dil_w"]                                    # (2C, C, 3)
    return dict(
        w_diff=params["diff_w"],                           # (C, C)   out,in
        b_diff=params["diff_b"][:, None],                  # (C, 1)
        # taps k=0 (t-d), k=1 (t), k=2 (t+d) fused along K -> (2C, 3C)
        w_dil=jnp.concatenate([w[:, :, 0], w[:, :, 1], w[:, :, 2]], axis=1),
        b_dil=params["dil_b"][:, None],
        w_cond=params["cond_w"][:, :, 0],                  # (2C, E)
        b_cond=params["cond_b"][:, None],
        w_mid=params["mid_w"][:, :, 0],                    # (2C, 2E)
        b_mid=params["mid_b"][:, None],
        w_ada=params["ada_w"][:, :, 0],                    # (4C, C)
        b_ada=params["ada_b"][:, None],
        w_out=params["out_w"][:, :, 0],                    # (2C, C)
        b_out=params["out_b"][:, None],
        g1w=params["g1_w"][:, None], g1b=params["g1_b"][:, None],
        g2w=params["g2_w"][:, None], g2b=params["g2_b"][:, None],
    )


def ada_norm_residual_block_forward(x, cond1, cond2, diffusion_step, packed,
                                    dilation, use_norm=True, mm_dtype=None,
                                    eps=1e-5):
    B, C, T = x.shape
    E = cond2.shape[1]
    assert cond1.shape == (B, C, T)
    assert E == C, "mid_projection(2E->2C) requires encoder_hidden == residual_channels"
    assert 0 < dilation < T, "dilated-conv shifts require 0 < dilation < T"
    if mm_dtype is None:
        mm_dtype = x.dtype   # set jnp.bfloat16 on v6e/v7x to halve DMA/VMEM bytes

    diff = diffusion_step[:, :, None]                      # (B, C, 1)

    # cast matmul weights once (biases / norm affine stay f32)
    w = {k: (v.astype(mm_dtype) if k.startswith("w_") else v)
         for k, v in packed.items()}

    kernel = partial(_ada_block_kernel, dilation, C, E, T,
                     bool(use_norm), float(eps), mm_dtype)

    def _wspec(shape):
        return pl.BlockSpec(shape, lambda b: (0, 0))       # weights: VMEM-resident

    res, skip = pl.pallas_call(
        kernel,
        out_shape=(jax.ShapeDtypeStruct((B, C, T), x.dtype),
                   jax.ShapeDtypeStruct((B, C, T), x.dtype)),
        grid_spec=pltpu.PrefetchScalarGridSpec(
            num_scalar_prefetch=0,
            grid=(B,),
            in_specs=[
                pl.BlockSpec((1, C, T), lambda b: (b, 0, 0)),   # x
                pl.BlockSpec((1, C, T), lambda b: (b, 0, 0)),   # cond1
                pl.BlockSpec((1, E, T), lambda b: (b, 0, 0)),   # cond2
                pl.BlockSpec((1, C, 1), lambda b: (b, 0, 0)),   # diffusion step
                _wspec((C, C)), _wspec((C, 1)),                 # diffusion_projection
                _wspec((2 * C, 3 * C)), _wspec((2 * C, 1)),     # dilated_conv (fused taps)
                _wspec((2 * C, E)), _wspec((2 * C, 1)),         # add_cond_projection
                _wspec((2 * C, 2 * E)), _wspec((2 * C, 1)),     # mid_projection
                _wspec((4 * C, C)), _wspec((4 * C, 1)),         # ada_modulation conv
                _wspec((2 * C, C)), _wspec((2 * C, 1)),         # output_projection
                _wspec((2 * C, 1)), _wspec((2 * C, 1)),         # norm1 gamma/beta
                _wspec((2 * C, 1)), _wspec((2 * C, 1)),         # norm2 gamma/beta
            ],
            out_specs=[
                pl.BlockSpec((1, C, T), lambda b: (b, 0, 0)),   # residual
                pl.BlockSpec((1, C, T), lambda b: (b, 0, 0)),   # skip
            ],
        ),
        compiler_params=pltpu.CompilerParams(
            dimension_semantics=("parallel",)),
    )(x, cond1, cond2, diff,
      w["w_diff"], w["b_diff"], w["w_dil"], w["b_dil"],
      w["w_cond"], w["b_cond"], w["w_mid"], w["b_mid"],
      w["w_ada"], w["b_ada"], w["w_out"], w["b_out"],
      w["g1w"], w["g1b"], w["g2w"], w["g2b"])

    return res, skip


def ref_forward(x, cond1, cond2, diffusion_step, params, dilation, use_norm,
                eps=1e-5):
    """Pure-JAX reference replicating the PyTorch forward (NCT layout)."""
    dn = ("NCH", "OIH", "NCH")

    def conv1x1(inp, w, b):
        return lax.conv_general_dilated(inp, w, (1,), "VALID",
                                        dimension_numbers=dn) + b[None, :, None]

    def gnorm(t, gamma, beta):   # GroupNorm(groups=channels): per-channel over T
        mu = jnp.mean(t, axis=2, keepdims=True)
        var = jnp.mean((t - mu) ** 2, axis=2, keepdims=True)
        return (t - mu) * lax.rsqrt(var + eps) * gamma[None, :, None] + beta[None, :, None]

    dstep = diffusion_step @ params["diff_w"].T + params["diff_b"]         # (B, C)
    y = x + dstep[:, :, None]
    ada = conv1x1(jax.nn.silu(cond1), params["ada_w"], params["ada_b"])    # (B, 4C, T)
    shift_msa, scale_msa = jnp.split(ada, 2, axis=1)
    dc = lax.conv_general_dilated(y, params["dil_w"], (1,),
                                  [(dilation, dilation)], rhs_dilation=(dilation,),
                                  dimension_numbers=dn) + params["dil_b"][None, :, None]
    n1 = gnorm(dc, params["g1_w"], params["g1_b"]) if use_norm else dc
    z = n1 + conv1x1(cond2, params["cond_w"], params["cond_b"])
    mid = conv1x1(z, params["mid_w"], params["mid_b"])
    n2 = gnorm(mid, params["g2_w"], params["g2_b"]) if use_norm else mid
    m = n2 * (1.0 + scale_msa) + shift_msa
    gate, filt = jnp.split(m, 2, axis=1)
    act = jax.nn.sigmoid(gate) * jnp.tanh(filt)
    o = conv1x1(act, params["out_w"], params["out_b"])
    residual, skip = jnp.split(o, 2, axis=1)
    return (x + residual) / SQRT2, skip


def init_params(key, encoder_hidden, residual_channels):
    C, E = residual_channels, encoder_hidden
    ks = jax.random.split(key, 12)

    def kaiming(k, shape, fan_in):           # kaiming_normal_ (gain sqrt(2))
        return jax.random.normal(k, shape, jnp.float32) * math.sqrt(2.0 / fan_in)

    def uni(k, shape, fan_in):               # default torch bias/linear init
        bound = 1.0 / math.sqrt(fan_in)
        return jax.random.uniform(k, shape, jnp.float32, -bound, bound)

    return {
        "dil_w": kaiming(ks[0], (2 * C, C, 3), C * 3),     # Conv1d(C, 2C, 3)
        "dil_b": uni(ks[1], (2 * C,), C * 3),
        "diff_w": uni(ks[2], (C, C), C),                   # Linear(C, C)
        "diff_b": uni(ks[3], (C,), C),
        "cond_w": kaiming(ks[4], (2 * C, E, 1), E),        # Conv1d(E, 2C, 1)
        "cond_b": uni(ks[5], (2 * C,), E),
        "mid_w": kaiming(ks[6], (2 * C, 2 * E, 1), 2 * E), # Conv1d(2E, 2C, 1)
        "mid_b": uni(ks[7], (2 * C,), 2 * E),
        "ada_w": kaiming(ks[8], (4 * C, C, 1), C),         # Conv1d(C, 4C, 1)
        "ada_b": uni(ks[9], (4 * C,), C),
        "out_w": kaiming(ks[10], (2 * C, C, 1), C),        # Conv1d(C, 2C, 1)
        "out_b": uni(ks[11], (2 * C,), C),
        "g1_w": jnp.ones((2 * C,), jnp.float32), "g1_b": jnp.zeros((2 * C,), jnp.float32),
        "g2_w": jnp.ones((2 * C,), jnp.float32), "g2_b": jnp.zeros((2 * C,), jnp.float32),
    }


if __name__ == "__main__":
    # small but alignment-realistic shapes (C multiple of 8, T multiple of 128)
    B, C, E, T, dilation = 2, 16, 16, 256, 4

    key = jax.random.PRNGKey(0)
    kx, k1, k2, kd, kp = jax.random.split(key, 5)
    x = jax.random.normal(kx, (B, C, T), jnp.float32)
    cond1 = jax.random.normal(k1, (B, C, T), jnp.float32)
    cond2 = jax.random.normal(k2, (B, E, T), jnp.float32)
    diffusion_step = jax.random.normal(kd, (B, C), jnp.float32)
    params = init_params(kp, E, C)
    packed = prepare_params(params)

    for use_norm in (True, False):
        res, skip = ada_norm_residual_block_forward(
            x, cond1, cond2, diffusion_step, packed, dilation, use_norm=use_norm)
        res = jax.block_until_ready(res)
        skip = jax.block_until_ready(skip)

        res_ref, skip_ref = ref_forward(x, cond1, cond2, diffusion_step, params,
                                        dilation, use_norm)
        assert res.shape == (B, C, T) and skip.shape == (B, C, T)
        assert jnp.allclose(res, res_ref, rtol=1e-4, atol=1e-4), \
            f"residual mismatch (use_norm={use_norm})"
        assert jnp.allclose(skip, skip_ref, rtol=1e-4, atol=1e-4), \
            f"skip mismatch (use_norm={use_norm})"

    print("KERNEL_OK")
</pallas_src>

<mosaic_0001>
module attributes {stable_mosaic.version = 11 : i64} {
  func.func @_ada_block_kernel(%arg0: i32, %arg1: memref<1x16x256xf32, #tpu.memory_space<vmem>>, %arg2: memref<1x16x256xf32, #tpu.memory_space<vmem>>, %arg3: memref<1x16x256xf32, #tpu.memory_space<vmem>>, %arg4: memref<1x16x1xf32, #tpu.memory_space<vmem>>, %arg5: memref<16x16xf32, #tpu.memory_space<vmem>>, %arg6: memref<16x1xf32, #tpu.memory_space<vmem>>, %arg7: memref<32x48xf32, #tpu.memory_space<vmem>>, %arg8: memref<32x1xf32, #tpu.memory_space<vmem>>, %arg9: memref<32x16xf32, #tpu.memory_space<vmem>>, %arg10: memref<32x1xf32, #tpu.memory_space<vmem>>, %arg11: memref<32x32xf32, #tpu.memory_space<vmem>>, %arg12: memref<32x1xf32, #tpu.memory_space<vmem>>, %arg13: memref<64x16xf32, #tpu.memory_space<vmem>>, %arg14: memref<64x1xf32, #tpu.memory_space<vmem>>, %arg15: memref<32x16xf32, #tpu.memory_space<vmem>>, %arg16: memref<32x1xf32, #tpu.memory_space<vmem>>, %arg17: memref<32x1xf32, #tpu.memory_space<vmem>>, %arg18: memref<32x1xf32, #tpu.memory_space<vmem>>, %arg19: memref<32x1xf32, #tpu.memory_space<vmem>>, %arg20: memref<32x1xf32, #tpu.memory_space<vmem>>, %arg21: memref<1x16x256xf32, #tpu.memory_space<vmem>>, %arg22: memref<1x16x256xf32, #tpu.memory_space<vmem>>) attributes {dimension_semantics = [#tpu.dimension_semantics<parallel>], iteration_bounds = array<i64: 2>, scalar_prefetch = 0 : i64, scratch_operands = 0 : i64, tpu.core_type = #tpu.core_type<tc>, window_params = [{transform_indices = @transform_0, window_bounds = array<i64: 1, 16, 256>}, {transform_indices = @transform_1, window_bounds = array<i64: 1, 16, 256>}, {transform_indices = @transform_2, window_bounds = array<i64: 1, 16, 256>}, {transform_indices = @transform_3, window_bounds = array<i64: 1, 16, 1>}, {pipeline_mode = #tpu.pipeline_mode<synchronous>, transform_indices = @transform_4, window_bounds = array<i64: 16, 16>}, {pipeline_mode = #tpu.pipeline_mode<synchronous>, transform_indices = @transform_5, window_bounds = array<i64: 16, 1>}, {pipeline_mode = #tpu.pipeline_mode<synchronous>, transform_indices = @transform_6, window_bounds = array<i64: 32, 48>}, {pipeline_mode = #tpu.pipeline_mode<synchronous>, transform_indices = @transform_7, window_bounds = array<i64: 32, 1>}, {pipeline_mode = #tpu.pipeline_mode<synchronous>, transform_indices = @transform_8, window_bounds = array<i64: 32, 16>}, {pipeline_mode = #tpu.pipeline_mode<synchronous>, transform_indices = @transform_9, window_bounds = array<i64: 32, 1>}, {pipeline_mode = #tpu.pipeline_mode<synchronous>, transform_indices = @transform_10, window_bounds = array<i64: 32, 32>}, {pipeline_mode = #tpu.pipeline_mode<synchronous>, transform_indices = @transform_11, window_bounds = array<i64: 32, 1>}, {pipeline_mode = #tpu.pipeline_mode<synchronous>, transform_indices = @transform_12, window_bounds = array<i64: 64, 16>}, {pipeline_mode = #tpu.pipeline_mode<synchronous>, transform_indices = @transform_13, window_bounds = array<i64: 64, 1>}, {pipeline_mode = #tpu.pipeline_mode<synchronous>, transform_indices = @transform_14, window_bounds = array<i64: 32, 16>}, {pipeline_mode = #tpu.pipeline_mode<synchronous>, transform_indices = @transform_15, window_bounds = array<i64: 32, 1>}, {pipeline_mode = #tpu.pipeline_mode<synchronous>, transform_indices = @transform_16, window_bounds = array<i64: 32, 1>}, {pipeline_mode = #tpu.pipeline_mode<synchronous>, transform_indices = @transform_17, window_bounds = array<i64: 32, 1>}, {pipeline_mode = #tpu.pipeline_mode<synchronous>, transform_indices = @transform_18, window_bounds = array<i64: 32, 1>}, {pipeline_mode = #tpu.pipeline_mode<synchronous>, transform_indices = @transform_19, window_bounds = array<i64: 32, 1>}, {transform_indices = @transform_20, window_bounds = array<i64: 1, 16, 256>}, {transform_indices = @transform_21, window_bounds = array<i64: 1, 16, 256>}]} {
    %c0 = arith.constant 0 : index
    %c0_0 = arith.constant 0 : index
    %c0_1 = arith.constant 0 : index
    %0 = vector.load %arg1[%c0, %c0_0, %c0_1] : memref<1x16x256xf32, #tpu.memory_space<vmem>>, vector<1x16x256xf32>
    %1 = vector.shape_cast %0 : vector<1x16x256xf32> to vector<16x256xf32>
    %c0_2 = arith.constant 0 : index
    %c0_3 = arith.constant 0 : index
    %c0_4 = arith.constant 0 : index
    %2 = vector.load %arg2[%c0_2, %c0_3, %c0_4] : memref<1x16x256xf32, #tpu.memory_space<vmem>>, vector<1x16x256xf32>
    %3 = vector.shape_cast %2 : vector<1x16x256xf32> to vector<16x256xf32>
    %c0_5 = arith.constant 0 : index
    %c0_6 = arith.constant 0 : index
    %c0_7 = arith.constant 0 : index
    %4 = vector.load %arg3[%c0_5, %c0_6, %c0_7] : memref<1x16x256xf32, #tpu.memory_space<vmem>>, vector<1x16x256xf32>
    %5 = vector.shape_cast %4 : vector<1x16x256xf32> to vector<16x256xf32>
    %c0_8 = arith.constant 0 : index
    %c0_9 = arith.constant 0 : index
    %c0_10 = arith.constant 0 : index
    %6 = vector.load %arg4[%c0_8, %c0_9, %c0_10] : memref<1x16x1xf32, #tpu.memory_space<vmem>>, vector<1x16x1xf32>
    %7 = vector.shape_cast %6 : vector<1x16x1xf32> to vector<16x1xf32>
    %c0_11 = arith.constant 0 : index
    %c0_12 = arith.constant 0 : index
    %8 = vector.load %arg5[%c0_11, %c0_12] : memref<16x16xf32, #tpu.memory_space<vmem>>, vector<16x16xf32>
    %cst = arith.constant dense<0.000000e+00> : vector<16x1xf32>
    %9 = tpu.matmul %8, %7, %cst {dimension_numbers = #tpu.dot_dimension_numbers<[1], [0], [0], [1], [0, 0, 1, 1], [], []>} : vector<16x16xf32>, vector<16x1xf32>, vector<16x1xf32> -> vector<16x1xf32>
    %c0_13 = arith.constant 0 : index
    %c0_14 = arith.constant 0 : index
    %10 = vector.load %arg6[%c0_13, %c0_14] : memref<16x1xf32, #tpu.memory_space<vmem>>, vector<16x1xf32>
    %11 = arith.addf %9, %10 : vector<16x1xf32>
    %12 = vector.broadcast %11 : vector<16x1xf32> to vector<16x256xf32>
    %13 = arith.addf %1, %12 : vector<16x256xf32>
    %14 = tpu.iota {dimensions = array<i32: 1>} : vector<1x256xi32>
    %cst_15 = arith.constant 0.000000e+00 : f32
    %15 = vector.broadcast %cst_15 : f32 to vector<16x256xf32>
    %c4_i32 = arith.constant 4 : i32
    %16 = vector.broadcast %c4_i32 : i32 to vector<1x256xi32>
    %17 = arith.cmpi sge, %14, %16 : vector<1x256xi32>
    %c4_i32_16 = arith.constant 4 : i32
    %18 = tpu.dynamic_rotate %13 by %c4_i32_16 dim 1 : vector<16x256xf32>, i32 -> vector<16x256xf32>
    %19 = vector.shape_cast %17 : vector<1x256xi1> to vector<1x256xi1>
    %20 = vector.broadcast %19 : vector<1x256xi1> to vector<16x256xi1>
    %21 = arith.select %20, %18, %15 : vector<16x256xi1>, vector<16x256xf32>
    %c252_i32 = arith.constant 252 : i32
    %22 = vector.broadcast %c252_i32 : i32 to vector<1x256xi32>
    %23 = arith.cmpi slt, %14, %22 : vector<1x256xi32>
    %c252_i32_17 = arith.constant 252 : i32
    %24 = tpu.dynamic_rotate %13 by %c252_i32_17 dim 1 : vector<16x256xf32>, i32 -> vector<16x256xf32>
    %25 = vector.shape_cast %23 : vector<1x256xi1> to vector<1x256xi1>
    %26 = vector.broadcast %25 : vector<1x256xi1> to vector<16x256xi1>
    %27 = arith.select %26, %24, %15 : vector<16x256xi1>, vector<16x256xf32>
    %28 = tpu.concatenate %21, %13, %27 in 0 : vector<16x256xf32>, vector<16x256xf32>, vector<16x256xf32> -> vector<48x256xf32>
    %c0_18 = arith.constant 0 : index
    %c0_19 = arith.constant 0 : index
    %29 = vector.load %arg7[%c0_18, %c0_19] : memref<32x48xf32, #tpu.memory_space<vmem>>, vector<32x48xf32>
    %cst_20 = arith.constant dense<0.000000e+00> : vector<32x256xf32>
    %30 = tpu.matmul %29, %28, %cst_20 {dimension_numbers = #tpu.dot_dimension_numbers<[1], [0], [0], [1], [0, 0, 1, 1], [], []>} : vector<32x48xf32>, vector<48x256xf32>, vector<32x256xf32> -> vector<32x256xf32>
    %c0_21 = arith.constant 0 : index
    %c0_22 = arith.constant 0 : index
    %31 = vector.load %arg8[%c0_21, %c0_22] : memref<32x1xf32, #tpu.memory_space<vmem>>, vector<32x1xf32>
    %32 = vector.broadcast %31 : vector<32x1xf32> to vector<32x256xf32>
    %33 = arith.addf %30, %32 : vector<32x256xf32>
    %cst_23 = arith.constant dense<0.000000e+00> : vector<32xf32>
    %34 = vector.multi_reduction <add>, %33, %cst_23 [1] : vector<32x256xf32> to vector<32xf32>
    %35 = vector.shape_cast %34 : vector<32xf32> to vector<32x1xf32>
    %cst_24 = arith.constant 2.560000e+02 : f32
    %36 = vector.broadcast %cst_24 : f32 to vector<32x1xf32>
    %37 = arith.divf %35, %36 : vector<32x1xf32>
    %38 = vector.broadcast %37 : vector<32x1xf32> to vector<32x256xf32>
    %39 = arith.subf %33, %38 : vector<32x256xf32>
    %40 = arith.mulf %39, %39 : vector<32x256xf32>
    %cst_25 = arith.constant dense<0.000000e+00> : vector<32xf32>
    %41 = vector.multi_reduction <add>, %40, %cst_25 [1] : vector<32x256xf32> to vector<32xf32>
    %42 = vector.shape_cast %41 : vector<32xf32> to vector<32x1xf32>
    %cst_26 = arith.constant 2.560000e+02 : f32
    %43 = vector.broadcast %cst_26 : f32 to vector<32x1xf32>
    %44 = arith.divf %42, %43 : vector<32x1xf32>
    %45 = vector.broadcast %37 : vector<32x1xf32> to vector<32x256xf32>
    %46 = arith.subf %33, %45 : vector<32x256xf32>
    %cst_27 = arith.constant 9.99999974E-6 : f32
    %47 = vector.broadcast %cst_27 : f32 to vector<32x1xf32>
    %48 = arith.addf %44, %47 : vector<32x1xf32>
    %49 = math.rsqrt %48 : vector<32x1xf32>
    %50 = vector.broadcast %49 : vector<32x1xf32> to vector<32x256xf32>
    %51 = arith.mulf %46, %50 : vector<32x256xf32>
    %c0_28 = arith.constant 0 : index
    %c0_29 = arith.constant 0 : index
    %52 = vector.load %arg17[%c0_28, %c0_29] : memref<32x1xf32, #tpu.memory_space<vmem>>, vector<32x1xf32>
    %53 = vector.broadcast %52 : vector<32x1xf32> to vector<32x256xf32>
    %54 = arith.mulf %51, %53 : vector<32x256xf32>
    %c0_30 = arith.constant 0 : index
    %c0_31 = arith.constant 0 : index
    %55 = vector.load %arg18[%c0_30, %c0_31] : memref<32x1xf32, #tpu.memory_space<vmem>>, vector<32x1xf32>
    %56 = vector.broadcast %55 : vector<32x1xf32> to vector<32x256xf32>
    %57 = arith.addf %54, %56 : vector<32x256xf32>
    %c0_32 = arith.constant 0 : index
    %c0_33 = arith.constant 0 : index
    %58 = vector.load %arg9[%c0_32, %c0_33] : memref<32x16xf32, #tpu.memory_space<vmem>>, vector<32x16xf32>
    %cst_34 = arith.constant dense<0.000000e+00> : vector<32x256xf32>
    %59 = tpu.matmul %58, %5, %cst_34 {dimension_numbers = #tpu.dot_dimension_numbers<[1], [0], [0], [1], [0, 0, 1, 1], [], []>} : vector<32x16xf32>, vector<16x256xf32>, vector<32x256xf32> -> vector<32x256xf32>
    %c0_35 = arith.constant 0 : index
    %c0_36 = arith.constant 0 : index
    %60 = vector.load %arg10[%c0_35, %c0_36] : memref<32x1xf32, #tpu.memory_space<vmem>>, vector<32x1xf32>
    %61 = vector.broadcast %60 : vector<32x1xf32> to vector<32x256xf32>
    %62 = arith.addf %59, %61 : vector<32x256xf32>
    %63 = arith.addf %57, %62 : vector<32x256xf32>
    %c0_37 = arith.constant 0 : index
    %c0_38 = arith.constant 0 : index
    %64 = vector.load %arg11[%c0_37, %c0_38] : memref<32x32xf32, #tpu.memory_space<vmem>>, vector<32x32xf32>
    %cst_39 = arith.constant dense<0.000000e+00> : vector<32x256xf32>
    %65 = tpu.matmul %64, %63, %cst_39 {dimension_numbers = #tpu.dot_dimension_numbers<[1], [0], [0], [1], [0, 0, 1, 1], [], []>} : vector<32x32xf32>, vector<32x256xf32>, vector<32x256xf32> -> vector<32x256xf32>
    %c0_40 = arith.constant 0 : index
    %c0_41 = arith.constant 0 : index
    %66 = vector.load %arg12[%c0_40, %c0_41] : memref<32x1xf32, #tpu.memory_space<vmem>>, vector<32x1xf32>
    %67 = vector.broadcast %66 : vector<32x1xf32> to vector<32x256xf32>
    %68 = arith.addf %65, %67 : vector<32x256xf32>
    %cst_42 = arith.constant dense<0.000000e+00> : vector<32xf32>
    %69 = vector.multi_reduction <add>, %68, %cst_42 [1] : vector<32x256xf32> to vector<32xf32>
    %70 = vector.shape_cast %69 : vector<32xf32> to vector<32x1xf32>
    %cst_43 = arith.constant 2.560000e+02 : f32
    %71 = vector.broadcast %cst_43 : f32 to vector<32x1xf32>
    %72 = arith.divf %70, %71 : vector<32x1xf32>
    %73 = vector.broadcast %72 : vector<32x1xf32> to vector<32x256xf32>
    %74 = arith.subf %68, %73 : vector<32x256xf32>
    %75 = arith.mulf %74, %74 : vector<32x256xf32>
    %cst_44 = arith.constant dense<0.000000e+00> : vector<32xf32>
    %76 = vector.multi_reduction <add>, %75, %cst_44 [1] : vector<32x256xf32> to vector<32xf32>
    %77 = vector.shape_cast %76 : vector<32xf32> to vector<32x1xf32>
    %cst_45 = arith.constant 2.560000e+02 : f32
    %78 = vector.broadcast %cst_45 : f32 to vector<32x1xf32>
    %79 = arith.divf %77, %78 : vector<32x1xf32>
    %80 = vector.broadcast %72 : vector<32x1xf32> to vector<32x256xf32>
    %81 = arith.subf %68, %80 : vector<32x256xf32>
    %cst_46 = arith.constant 9.99999974E-6 : f32
    %82 = vector.broadcast %cst_46 : f32 to vector<32x1xf32>
    %83 = arith.addf %79, %82 : vector<32x1xf32>
    %84 = math.rsqrt %83 : vector<32x1xf32>
    %85 = vector.broadcast %84 : vector<32x1xf32> to vector<32x256xf32>
    %86 = arith.mulf %81, %85 : vector<32x256xf32>
    %c0_47 = arith.constant 0 : index
    %c0_48 = arith.constant 0 : index
    %87 = vector.load %arg19[%c0_47, %c0_48] : memref<32x1xf32, #tpu.memory_space<vmem>>, vector<32x1xf32>
    %88 = vector.broadcast %87 : vector<32x1xf32> to vector<32x256xf32>
    %89 = arith.mulf %86, %88 : vector<32x256xf32>
    %c0_49 = arith.constant 0 : index
    %c0_50 = arith.constant 0 : index
    %90 = vector.load %arg20[%c0_49, %c0_50] : memref<32x1xf32, #tpu.memory_space<vmem>>, vector<32x1xf32>
    %91 = vector.broadcast %90 : vector<32x1xf32> to vector<32x256xf32>
    %92 = arith.addf %89, %91 : vector<32x256xf32>
    %c0_51 = arith.constant 0 : index
    %c0_52 = arith.constant 0 : index
    %93 = vector.load %arg13[%c0_51, %c0_52] : memref<64x16xf32, #tpu.memory_space<vmem>>, vector<64x16xf32>
    %94 = arith.negf %3 : vector<16x256xf32>
    %95 = math.exp %94 : vector<16x256xf32>
    %cst_53 = arith.constant 1.000000e+00 : f32
    %96 = vector.broadcast %cst_53 : f32 to vector<16x256xf32>
    %97 = arith.addf %96, %95 : vector<16x256xf32>
    %98 = arith.divf %96, %97 : vector<16x256xf32>
    %99 = arith.mulf %3, %98 : vector<16x256xf32>
    %cst_54 = arith.constant dense<0.000000e+00> : vector<64x256xf32>
    %100 = tpu.matmul %93, %99, %cst_54 {dimension_numbers = #tpu.dot_dimension_numbers<[1], [0], [0], [1], [0, 0, 1, 1], [], []>} : vector<64x16xf32>, vector<16x256xf32>, vector<64x256xf32> -> vector<64x256xf32>
    %c0_55 = arith.constant 0 : index
    %c0_56 = arith.constant 0 : index
    %101 = vector.load %arg14[%c0_55, %c0_56] : memref<64x1xf32, #tpu.memory_space<vmem>>, vector<64x1xf32>
    %102 = vector.broadcast %101 : vector<64x1xf32> to vector<64x256xf32>
    %103 = arith.addf %100, %102 : vector<64x256xf32>
    %104 = vector.extract_strided_slice %103 {offsets = [0, 0], sizes = [32, 256], strides = [1, 1]} : vector<64x256xf32> to vector<32x256xf32>
    %105 = vector.extract_strided_slice %103 {offsets = [32, 0], sizes = [32, 256], strides = [1, 1]} : vector<64x256xf32> to vector<32x256xf32>
    %cst_57 = arith.constant 1.000000e+00 : f32
    %106 = vector.broadcast %cst_57 : f32 to vector<32x256xf32>
    %107 = arith.addf %106, %105 : vector<32x256xf32>
    %108 = arith.mulf %92, %107 : vector<32x256xf32>
    %109 = arith.addf %108, %104 : vector<32x256xf32>
    %110 = vector.extract_strided_slice %109 {offsets = [0, 0], sizes = [16, 256], strides = [1, 1]} : vector<32x256xf32> to vector<16x256xf32>
    %111 = vector.extract_strided_slice %109 {offsets = [16, 0], sizes = [16, 256], strides = [1, 1]} : vector<32x256xf32> to vector<16x256xf32>
    %112 = arith.negf %110 : vector<16x256xf32>
    %113 = math.exp %112 : vector<16x256xf32>
    %cst_58 = arith.constant 1.000000e+00 : f32
    %114 = vector.broadcast %cst_58 : f32 to vector<16x256xf32>
    %115 = arith.addf %114, %113 : vector<16x256xf32>
    %116 = arith.divf %114, %115 : vector<16x256xf32>
    %117 = math.tanh %111 : vector<16x256xf32>
    %118 = arith.mulf %116, %117 : vector<16x256xf32>
    %c0_59 = arith.constant 0 : index
    %c0_60 = arith.constant 0 : index
    %119 = vector.load %arg15[%c0_59, %c0_60] : memref<32x16xf32, #tpu.memory_space<vmem>>, vector<32x16xf32>
    %cst_61 = arith.constant dense<0.000000e+00> : vector<32x256xf32>
    %120 = tpu.matmul %119, %118, %cst_61 {dimension_numbers = #tpu.dot_dimension_numbers<[1], [0], [0], [1], [0, 0, 1, 1], [], []>} : vector<32x16xf32>, vector<16x256xf32>, vector<32x256xf32> -> vector<32x256xf32>
    %c0_62 = arith.constant 0 : index
    %c0_63 = arith.constant 0 : index
    %121 = vector.load %arg16[%c0_62, %c0_63] : memref<32x1xf32, #tpu.memory_space<vmem>>, vector<32x1xf32>
    %122 = vector.broadcast %121 : vector<32x1xf32> to vector<32x256xf32>
    %123 = arith.addf %120, %122 : vector<32x256xf32>
    %124 = vector.extract_strided_slice %123 {offsets = [0, 0], sizes = [16, 256], strides = [1, 1]} : vector<32x256xf32> to vector<16x256xf32>
    %125 = arith.addf %1, %124 : vector<16x256xf32>
    %cst_64 = arith.constant 0.707106769 : f32
    %126 = vector.broadcast %cst_64 : f32 to vector<16x256xf32>
    %127 = arith.mulf %125, %126 : vector<16x256xf32>
    %c0_65 = arith.constant 0 : index
    %c0_66 = arith.constant 0 : index
    %c0_67 = arith.constant 0 : index
    %128 = vector.load %arg21[%c0_65, %c0_66, %c0_67] : memref<1x16x256xf32, #tpu.memory_space<vmem>>, vector<1x16x256xf32>
    %129 = vector.shape_cast %128 : vector<1x16x256xf32> to vector<16x256xf32>
    %130 = vector.shape_cast %127 : vector<16x256xf32> to vector<1x16x256xf32>
    tpu.vector_store %arg21[%c0_65, %c0_66, %c0_67], %130 {strides = array<i32>} : memref<1x16x256xf32, #tpu.memory_space<vmem>>, vector<1x16x256xf32>,
    %131 = vector.extract_strided_slice %123 {offsets = [16, 0], sizes = [16, 256], strides = [1, 1]} : vector<32x256xf32> to vector<16x256xf32>
    %c0_68 = arith.constant 0 : index
    %c0_69 = arith.constant 0 : index
    %c0_70 = arith.constant 0 : index
    %132 = vector.load %arg22[%c0_68, %c0_69, %c0_70] : memref<1x16x256xf32, #tpu.memory_space<vmem>>, vector<1x16x256xf32>
    %133 = vector.shape_cast %132 : vector<1x16x256xf32> to vector<16x256xf32>
    %134 = vector.shape_cast %131 : vector<16x256xf32> to vector<1x16x256xf32>
    tpu.vector_store %arg22[%c0_68, %c0_69, %c0_70], %134 {strides = array<i32>} : memref<1x16x256xf32, #tpu.memory_space<vmem>>, vector<1x16x256xf32>,
    return
  }
  func.func @transform_0(%arg0: i32) -> (i32, i32, i32) {
    %c0_i32 = arith.constant 0 : i32
    %c0_i32_0 = arith.constant 0 : i32
    %c0_i32_1 = arith.constant 0 : i32
    return %arg0, %c0_i32, %c0_i32_0 : i32, i32, i32
  }
  func.func @transform_1(%arg0: i32) -> (i32, i32, i32) {
    %c0_i32 = arith.constant 0 : i32
    %c0_i32_0 = arith.constant 0 : i32
    %c0_i32_1 = arith.constant 0 : i32
    return %arg0, %c0_i32, %c0_i32_0 : i32, i32, i32
  }
  func.func @transform_2(%arg0: i32) -> (i32, i32, i32) {
    %c0_i32 = arith.constant 0 : i32
    %c0_i32_0 = arith.constant 0 : i32
    %c0_i32_1 = arith.constant 0 : i32
    return %arg0, %c0_i32, %c0_i32_0 : i32, i32, i32
  }
  func.func @transform_3(%arg0: i32) -> (i32, i32, i32) {
    %c0_i32 = arith.constant 0 : i32
    %c0_i32_0 = arith.constant 0 : i32
    %c0_i32_1 = arith.constant 0 : i32
    return %arg0, %c0_i32, %c0_i32_0 : i32, i32, i32
  }
  func.func @transform_4(%arg0: i32) -> (i32, i32) {
    %c0_i32 = arith.constant 0 : i32
    %c0_i32_0 = arith.constant 0 : i32
    %c0_i32_1 = arith.constant 0 : i32
    return %c0_i32, %c0_i32_0 : i32, i32
  }
  func.func @transform_5(%arg0: i32) -> (i32, i32) {
    %c0_i32 = arith.constant 0 : i32
    %c0_i32_0 = arith.constant 0 : i32
    %c0_i32_1 = arith.constant 0 : i32
    return %c0_i32, %c0_i32_0 : i32, i32
  }
  func.func @transform_6(%arg0: i32) -> (i32, i32) {
    %c0_i32 = arith.constant 0 : i32
    %c0_i32_0 = arith.constant 0 : i32
    %c0_i32_1 = arith.constant 0 : i32
    return %c0_i32, %c0_i32_0 : i32, i32
  }
  func.func @transform_7(%arg0: i32) -> (i32, i32) {
    %c0_i32 = arith.constant 0 : i32
    %c0_i32_0 = arith.constant 0 : i32
    %c0_i32_1 = arith.constant 0 : i32
    return %c0_i32, %c0_i32_0 : i32, i32
  }
  func.func @transform_8(%arg0: i32) -> (i32, i32) {
    %c0_i32 = arith.constant 0 : i32
    %c0_i32_0 = arith.constant 0 : i32
    %c0_i32_1 = arith.constant 0 : i32
    return %c0_i32, %c0_i32_0 : i32, i32
  }
  func.func @transform_9(%arg0: i32) -> (i32, i32) {
    %c0_i32 = arith.constant 0 : i32
    %c0_i32_0 = arith.constant 0 : i32
    %c0_i32_1 = arith.constant 0 : i32
    return %c0_i32, %c0_i32_0 : i32, i32
  }
  func.func @transform_10(%arg0: i32) -> (i32, i32) {
    %c0_i32 = arith.constant 0 : i32
    %c0_i32_0 = arith.constant 0 : i32
    %c0_i32_1 = arith.constant 0 : i32
    return %c0_i32, %c0_i32_0 : i32, i32
  }
  func.func @transform_11(%arg0: i32) -> (i32, i32) {
    %c0_i32 = arith.constant 0 : i32
    %c0_i32_0 = arith.constant 0 : i32
    %c0_i32_1 = arith.constant 0 : i32
    return %c0_i32, %c0_i32_0 : i32, i32
  }
  func.func @transform_12(%arg0: i32) -> (i32, i32) {
    %c0_i32 = arith.constant 0 : i32
    %c0_i32_0 = arith.constant 0 : i32
    %c0_i32_1 = arith.constant 0 : i32
    return %c0_i32, %c0_i32_0 : i32, i32
  }
  func.func @transform_13(%arg0: i32) -> (i32, i32) {
    %c0_i32 = arith.constant 0 : i32
    %c0_i32_0 = arith.constant 0 : i32
    %c0_i32_1 = arith.constant 0 : i32
    return %c0_i32, %c0_i32_0 : i32, i32
  }
  func.func @transform_14(%arg0: i32) -> (i32, i32) {
    %c0_i32 = arith.constant 0 : i32
    %c0_i32_0 = arith.constant 0 : i32
    %c0_i32_1 = arith.constant 0 : i32
    return %c0_i32, %c0_i32_0 : i32, i32
  }
  func.func @transform_15(%arg0: i32) -> (i32, i32) {
    %c0_i32 = arith.constant 0 : i32
    %c0_i32_0 = arith.constant 0 : i32
    %c0_i32_1 = arith.constant 0 : i32
    return %c0_i32, %c0_i32_0 : i32, i32
  }
  func.func @transform_16(%arg0: i32) -> (i32, i32) {
    %c0_i32 = arith.constant 0 : i32
    %c0_i32_0 = arith.constant 0 : i32
    %c0_i32_1 = arith.constant 0 : i32
    return %c0_i32, %c0_i32_0 : i32, i32
  }
  func.func @transform_17(%arg0: i32) -> (i32, i32) {
    %c0_i32 = arith.constant 0 : i32
    %c0_i32_0 = arith.constant 0 : i32
    %c0_i32_1 = arith.constant 0 : i32
    return %c0_i32, %c0_i32_0 : i32, i32
  }
  func.func @transform_18(%arg0: i32) -> (i32, i32) {
    %c0_i32 = arith.constant 0 : i32
    %c0_i32_0 = arith.constant 0 : i32
    %c0_i32_1 = arith.constant 0 : i32
    return %c0_i32, %c0_i32_0 : i32, i32
  }
  func.func @transform_19(%arg0: i32) -> (i32, i32) {
    %c0_i32 = arith.constant 0 : i32
    %c0_i32_0 = arith.constant 0 : i32
    %c0_i32_1 = arith.constant 0 : i32
    return %c0_i32, %c0_i32_0 : i32, i32
  }
  func.func @transform_20(%arg0: i32) -> (i32, i32, i32) {
    %c0_i32 = arith.constant 0 : i32
    %c0_i32_0 = arith.constant 0 : i32
    %c0_i32_1 = arith.constant 0 : i32
    return %arg0, %c0_i32, %c0_i32_0 : i32, i32, i32
  }
  func.func @transform_21(%arg0: i32) -> (i32, i32, i32) {
    %c0_i32 = arith.constant 0 : i32
    %c0_i32_0 = arith.constant 0 : i32
    %c0_i32_1 = arith.constant 0 : i32
    return %arg0, %c0_i32, %c0_i32_0 : i32, i32, i32
  }
}

</mosaic_0001>

<llo_original>
// kernel: tpu_custom_call.1
$region0: #{tpu_custom_call.1}
  #allocation0 [shape = 'u32[]', space=smem, size = 0x4, offset = 0x4, fixed_abs, tag = 'smem constant byte address 0x4 - core index']
  #allocation1 [shape = 'u32[144,128]{1,0:T(1,128)}', space=vmem, size = 0x12000, scoped, tag = 'internal scratch']
  %s0 = inlined_call_operand.vmem [shape: f32[2,16,256], index: 0, kind: input, shape index: {}]
  %s1 = inlined_call_operand.vmem [shape: f32[2,16,256], index: 1, kind: input, shape index: {}]
  %s2 = inlined_call_operand.vmem [shape: f32[2,16,256], index: 2, kind: input, shape index: {}]
  %s3 = inlined_call_operand.vmem [shape: f32[2,16,1], index: 3, kind: input, shape index: {}]
  %s4 = inlined_call_operand.vmem [shape: f32[16,16], index: 4, kind: input, shape index: {}]
  %s5 = inlined_call_operand.vmem [shape: f32[16,1], index: 5, kind: input, shape index: {}]
  %s6 = inlined_call_operand.vmem [shape: f32[32,48], index: 6, kind: input, shape index: {}]
  %s7 = inlined_call_operand.vmem [shape: f32[32,1], index: 7, kind: input, shape index: {}]
  %s8 = inlined_call_operand.vmem [shape: f32[32,16], index: 8, kind: input, shape index: {}]
  %s9 = inlined_call_operand.vmem [shape: f32[32,1], index: 9, kind: input, shape index: {}]
  %s10 = inlined_call_operand.vmem [shape: f32[32,32], index: 10, kind: input, shape index: {}]
  %s11 = inlined_call_operand.vmem [shape: f32[32,1], index: 11, kind: input, shape index: {}]
  %s12 = inlined_call_operand.vmem [shape: f32[64,16], index: 12, kind: input, shape index: {}]
  %s13 = inlined_call_operand.vmem [shape: f32[64,1], index: 13, kind: input, shape index: {}]
  %s14 = inlined_call_operand.vmem [shape: f32[32,16], index: 14, kind: input, shape index: {}]
  %s15 = inlined_call_operand.vmem [shape: f32[32,1], index: 15, kind: input, shape index: {}]
  %s16 = inlined_call_operand.vmem [shape: f32[32,1], index: 16, kind: input, shape index: {}]
  %s17 = inlined_call_operand.vmem [shape: f32[32,1], index: 17, kind: input, shape index: {}]
  %s18 = inlined_call_operand.vmem [shape: f32[32,1], index: 18, kind: input, shape index: {}]
  %s19 = inlined_call_operand.vmem [shape: f32[32,1], index: 19, kind: input, shape index: {}]
  %s20 = inlined_call_operand.hbm [shape: f32[2,16,256], index: 20, kind: output, shape index: {0}]
  %s21 = inlined_call_operand.hbm [shape: f32[2,16,256], index: 21, kind: output, shape index: {1}]
  %22 = xla_tuple %s20, %s21
  %s23 = sld [smem:[#allocation0]]
  $region121: #{tpu_custom_call.1} parent=0
    _
  %s25 = ssub.s32 1, %s23
  %s26 = scalar_select 0, %s25, %s23
  $region1: #{tpu_custom_call.1} parent=0
    #allocation2 [shape = 'u8[32768]{0}', space=vmem, size = 0x8000, scoped, tag = 'output window, operand 0']
    #allocation3 [shape = 's32[2]{0}', space=sflag, size = 0x8, scoped, tag = 'scoped memory for tpu_custom_call.1']
    #allocation4 [shape = 'u8[32768]{0}', space=vmem, size = 0x8000, scoped, tag = 'output window, operand 1']
    #allocation5 [shape = 's32[2]{0}', space=sflag, size = 0x8, scoped, tag = 'scoped memory for tpu_custom_call.1']
    %27 = vsyncpa [#allocation3], 0
    %s28 = scalar_lea.sflag [#allocation3], 1
    %29 = vsyncpa %s28, 0
    %30 = vsyncpa [#allocation5], 0
    %s31 = scalar_lea.sflag [#allocation5], 1
    %32 = vsyncpa %s31, 0
    loop: start=0, step=1, limit=4
    $region2: #{tpu_custom_call.1} parent=1 // loop_pre_header
      _
    $region3: #{tpu_custom_call.1} parent=1 // loop_header
      %s34 = sphi 0, %s38
      %p35 = scmp.ge.s32.totalorder %s34, 4
      %s44 = sphi 0, %s46
      %s47 = sphi 0, %s44
      %s48 = sphi 0, %s47
      %s64 = sphi 0, %s48
      %s70 = sphi 0, %s72
      %s73 = sphi 0, %s70
      %s74 = sphi 0, %s73
      %s90 = sphi 0, %s74
      %s96 = sphi 0, %s98
      %s99 = sphi 0, %s96
      %s100 = sphi 0, %s99
      %s116 = sphi 0, %s100
      %s122 = sphi 0, %s124
      %s125 = sphi 0, %s122
      %s126 = sphi 0, %s125
      %s142 = sphi 0, %s126
      %s146 = sphi 0, %s146
      %s148 = sphi 0, %s146
      %s149 = sphi 0, %s148
      %s163 = sphi 0, %s149
      %s167 = sphi 0, %s167
      %s169 = sphi 0, %s167
      %s170 = sphi 0, %s169
      %s184 = sphi 0, %s170
      %s188 = sphi 0, %s188
      %s190 = sphi 0, %s188
      %s191 = sphi 0, %s190
      %s205 = sphi 0, %s191
      %s209 = sphi 0, %s209
      %s211 = sphi 0, %s209
      %s212 = sphi 0, %s211
      %s226 = sphi 0, %s212
      %s230 = sphi 0, %s230
      %s232 = sphi 0, %s230
      %s233 = sphi 0, %s232
      %s247 = sphi 0, %s233
      %s251 = sphi 0, %s251
      %s253 = sphi 0, %s251
      %s254 = sphi 0, %s253
      %s268 = sphi 0, %s254
      %s272 = sphi 0, %s272
      %s274 = sphi 0, %s272
      %s275 = sphi 0, %s274
      %s289 = sphi 0, %s275
      %s293 = sphi 0, %s293
      %s295 = sphi 0, %s293
      %s296 = sphi 0, %s295
      %s310 = sphi 0, %s296
      %s314 = sphi 0, %s314
      %s316 = sphi 0, %s314
      %s317 = sphi 0, %s316
      %s331 = sphi 0, %s317
      %s335 = sphi 0, %s335
      %s337 = sphi 0, %s335
      %s338 = sphi 0, %s337
      %s352 = sphi 0, %s338
      %s356 = sphi 0, %s356
      %s358 = sphi 0, %s356
      %s359 = sphi 0, %s358
      %s373 = sphi 0, %s359
      %s377 = sphi 0, %s377
      %s379 = sphi 0, %s377
      %s380 = sphi 0, %s379
      %s394 = sphi 0, %s380
      %s398 = sphi 0, %s398
      %s400 = sphi 0, %s398
      %s401 = sphi 0, %s400
      %s415 = sphi 0, %s401
      %s419 = sphi 0, %s419
      %s421 = sphi 0, %s419
      %s422 = sphi 0, %s421
      %s436 = sphi 0, %s422
      %s440 = sphi 0, %s440
      %s442 = sphi 0, %s440
      %s443 = sphi 0, %s442
      %s457 = sphi 0, %s443
      %s461 = sphi 0, %s461
      %s463 = sphi 0, %s461
      %s464 = sphi 0, %s463
      %s478 = sphi 0, %s464
      %s484 = sphi 0, %s486
      %s487 = sphi 0, %s484
      %s488 = sphi 0, %s487
      %s504 = sphi 0, %s488
      %s510 = sphi 0, %s512
      %s513 = sphi 0, %s510
      %s514 = sphi 0, %s513
      %s530 = sphi 0, %s514
    $region4: #{tpu_custom_call.1} parent=1 // loop_header_branch
      %37 = sbr.rel (%p35) target = $region8
    $region5: #{tpu_custom_call.1} parent=1 // loop_body
      %s39 = ssub.s32 %s34, 1
      %s40 = ssub.s32 %s34, 2
      %s41 = sadd.s32 %s34, 1
      %s42 = ssub.s32 %s34, %s41
      %p43 = scmp.eq.s32.totalorder %s42, 0
      %s45 = sadd.s32 %s44, 1
      %s46 = scalar_select %p43, %s44, %s45
      %p49 = pneg %p43
      %p50 = scmp.eq.s32.totalorder %s34, 1
      %p51 = por %p49, %p50
      %p52 = scmp.ne.s32.totalorder %s44, %s47
      %p53 = scmp.eq.s32.totalorder %s34, 0
      %p54 = por %p52, %p53
      %p55 = scmp.ne.s32.totalorder %s44, %s47
      %p56 = scmp.eq.s32.totalorder %s39, 1
      %p57 = por %p55, %p56
      %p58 = scmp.ne.s32.totalorder %s47, %s48
      %p59 = scmp.eq.s32.totalorder %s39, 0
      %p60 = por %p58, %p59
      %p61 = scmp.ne.s32.totalorder %s47, %s48
      %p62 = scmp.eq.s32.totalorder %s40, 1
      %p63 = por %p61, %p62
      %p65 = scmp.ne.s32.totalorder %s48, %s64
      %p66 = scmp.eq.s32.totalorder %s40, 0
      %p67 = por %p65, %p66
      %s68 = ssub.s32 %s34, %s41
      %p69 = scmp.eq.s32.totalorder %s68, 0
      %s71 = sadd.s32 %s70, 1
      %s72 = scalar_select %p69, %s70, %s71
      %p75 = pneg %p69
      %p76 = scmp.eq.s32.totalorder %s34, 1
      %p77 = por %p75, %p76
      %p78 = scmp.ne.s32.totalorder %s70, %s73
      %p79 = scmp.eq.s32.totalorder %s34, 0
      %p80 = por %p78, %p79
      %p81 = scmp.ne.s32.totalorder %s70, %s73
      %p82 = scmp.eq.s32.totalorder %s39, 1
      %p83 = por %p81, %p82
      %p84 = scmp.ne.s32.totalorder %s73, %s74
      %p85 = scmp.eq.s32.totalorder %s39, 0
      %p86 = por %p84, %p85
      %p87 = scmp.ne.s32.totalorder %s73, %s74
      %p88 = scmp.eq.s32.totalorder %s40, 1
      %p89 = por %p87, %p88
      %p91 = scmp.ne.s32.totalorder %s74, %s90
      %p92 = scmp.eq.s32.totalorder %s40, 0
      %p93 = por %p91, %p92
      %s94 = ssub.s32 %s34, %s41
      %p95 = scmp.eq.s32.totalorder %s94, 0
      %s97 = sadd.s32 %s96, 1
      %s98 = scalar_select %p95, %s96, %s97
      %p101 = pneg %p95
      %p102 = scmp.eq.s32.totalorder %s34, 1
      %p103 = por %p101, %p102
      %p104 = scmp.ne.s32.totalorder %s96, %s99
      %p105 = scmp.eq.s32.totalorder %s34, 0
      %p106 = por %p104, %p105
      %p107 = scmp.ne.s32.totalorder %s96, %s99
      %p108 = scmp.eq.s32.totalorder %s39, 1
      %p109 = por %p107, %p108
      %p110 = scmp.ne.s32.totalorder %s99, %s100
      %p111 = scmp.eq.s32.totalorder %s39, 0
      %p112 = por %p110, %p111
      %p113 = scmp.ne.s32.totalorder %s99, %s100
      %p114 = scmp.eq.s32.totalorder %s40, 1
      %p115 = por %p113, %p114
      %p117 = scmp.ne.s32.totalorder %s100, %s116
      %p118 = scmp.eq.s32.totalorder %s40, 0
      %p119 = por %p117, %p118
      %s120 = ssub.s32 %s34, %s41
      %p121 = scmp.eq.s32.totalorder %s120, 0
      %s123 = sadd.s32 %s122, 1
      %s124 = scalar_select %p121, %s122, %s123
      %p127 = pneg %p121
      %p128 = scmp.eq.s32.totalorder %s34, 1
      %p129 = por %p127, %p128
      %p130 = scmp.ne.s32.totalorder %s122, %s125
      %p131 = scmp.eq.s32.totalorder %s34, 0
      %p132 = por %p130, %p131
      %p133 = scmp.ne.s32.totalorder %s122, %s125
      %p134 = scmp.eq.s32.totalorder %s39, 1
      %p135 = por %p133, %p134
      %p136 = scmp.ne.s32.totalorder %s125, %s126
      %p137 = scmp.eq.s32.totalorder %s39, 0
      %p138 = por %p136, %p137
      %p139 = scmp.ne.s32.totalorder %s125, %s126
      %p140 = scmp.eq.s32.totalorder %s40, 1
      %p141 = por %p139, %p140
      %p143 = scmp.ne.s32.totalorder %s126, %s142
      %p144 = scmp.eq.s32.totalorder %s40, 0
      %p145 = por %p143, %p144
      %s147 = sadd.s32 %s146, 1
      %p150 = scmp.eq.s32.totalorder %s34, 1
      %p151 = scmp.ne.s32.totalorder %s146, %s148
      %p152 = scmp.eq.s32.totalorder %s34, 0
      %p153 = por %p151, %p152
      %p154 = scmp.ne.s32.totalorder %s146, %s148
      %p155 = scmp.eq.s32.totalorder %s39, 1
      %p156 = por %p154, %p155
      %p157 = scmp.ne.s32.totalorder %s148, %s149
      %p158 = scmp.eq.s32.totalorder %s39, 0
      %p159 = por %p157, %p158
      %p160 = scmp.ne.s32.totalorder %s148, %s149
      %p161 = scmp.eq.s32.totalorder %s40, 1
      %p162 = por %p160, %p161
      %p164 = scmp.ne.s32.totalorder %s149, %s163
      %p165 = scmp.eq.s32.totalorder %s40, 0
      %p166 = por %p164, %p165
      %s168 = sadd.s32 %s167, 1
      %p171 = scmp.eq.s32.totalorder %s34, 1
      %p172 = scmp.ne.s32.totalorder %s167, %s169
      %p173 = scmp.eq.s32.totalorder %s34, 0
      %p174 = por %p172, %p173
      %p175 = scmp.ne.s32.totalorder %s167, %s169
      %p176 = scmp.eq.s32.totalorder %s39, 1
      %p177 = por %p175, %p176
      %p178 = scmp.ne.s32.totalorder %s169, %s170
      %p179 = scmp.eq.s32.totalorder %s39, 0
      %p180 = por %p178, %p179
      %p181 = scmp.ne.s32.totalorder %s169, %s170
      %p182 = scmp.eq.s32.totalorder %s40, 1
      %p183 = por %p181, %p182
      %p185 = scmp.ne.s32.totalorder %s170, %s184
      %p186 = scmp.eq.s32.totalorder %s40, 0
      %p187 = por %p185, %p186
      %s189 = sadd.s32 %s188, 1
      %p192 = scmp.eq.s32.totalorder %s34, 1
      %p193 = scmp.ne.s32.totalorder %s188, %s190
      %p194 = scmp.eq.s32.totalorder %s34, 0
      %p195 = por %p193, %p194
      %p196 = scmp.ne.s32.totalorder %s188, %s190
      %p197 = scmp.eq.s32.totalorder %s39, 1
      %p198 = por %p196, %p197
      %p199 = scmp.ne.s32.totalorder %s190, %s191
      %p200 = scmp.eq.s32.totalorder %s39, 0
      %p201 = por %p199, %p200
      %p202 = scmp.ne.s32.totalorder %s190, %s191
      %p203 = scmp.eq.s32.totalorder %s40, 1
      %p204 = por %p202, %p203
      %p206 = scmp.ne.s32.totalorder %s191, %s205
      %p207 = scmp.eq.s32.totalorder %s40, 0
      %p208 = por %p206, %p207
      %s210 = sadd.s32 %s209, 1
      %p213 = scmp.eq.s32.totalorder %s34, 1
      %p214 = scmp.ne.s32.totalorder %s209, %s211
      %p215 = scmp.eq.s32.totalorder %s34, 0
      %p216 = por %p214, %p215
      %p217 = scmp.ne.s32.totalorder %s209, %s211
      %p218 = scmp.eq.s32.totalorder %s39, 1
      %p219 = por %p217, %p218
      %p220 = scmp.ne.s32.totalorder %s211, %s212
      %p221 = scmp.eq.s32.totalorder %s39, 0
      %p222 = por %p220, %p221
      %p223 = scmp.ne.s32.totalorder %s211, %s212
      %p224 = scmp.eq.s32.totalorder %s40, 1
      %p225 = por %p223, %p224
      %p227 = scmp.ne.s32.totalorder %s212, %s226
      %p228 = scmp.eq.s32.totalorder %s40, 0
      %p229 = por %p227, %p228
      %s231 = sadd.s32 %s230, 1
      %p234 = scmp.eq.s32.totalorder %s34, 1
      %p235 = scmp.ne.s32.totalorder %s230, %s232
      %p236 = scmp.eq.s32.totalorder %s34, 0
      %p237 = por %p235, %p236
      %p238 = scmp.ne.s32.totalorder %s230, %s232
      %p239 = scmp.eq.s32.totalorder %s39, 1
      %p240 = por %p238, %p239
      %p241 = scmp.ne.s32.totalorder %s232, %s233
      %p242 = scmp.eq.s32.totalorder %s39, 0
      %p243 = por %p241, %p242
      %p244 = scmp.ne.s32.totalorder %s232, %s233
      %p245 = scmp.eq.s32.totalorder %s40, 1
      %p246 = por %p244, %p245
      %p248 = scmp.ne.s32.totalorder %s233, %s247
      %p249 = scmp.eq.s32.totalorder %s40, 0
      %p250 = por %p248, %p249
      %s252 = sadd.s32 %s251, 1
      %p255 = scmp.eq.s32.totalorder %s34, 1
      %p256 = scmp.ne.s32.totalorder %s251, %s253
      %p257 = scmp.eq.s32.totalorder %s34, 0
      %p258 = por %p256, %p257
      %p259 = scmp.ne.s32.totalorder %s251, %s253
      %p260 = scmp.eq.s32.totalorder %s39, 1
      %p261 = por %p259, %p260
      %p262 = scmp.ne.s32.totalorder %s253, %s254
      %p263 = scmp.eq.s32.totalorder %s39, 0
      %p264 = por %p262, %p263
      %p265 = scmp.ne.s32.totalorder %s253, %s254
      %p266 = scmp.eq.s32.totalorder %s40, 1
      %p267 = por %p265, %p266
      %p269 = scmp.ne.s32.totalorder %s254, %s268
      %p270 = scmp.eq.s32.totalorder %s40, 0
      %p271 = por %p269, %p270
      %s273 = sadd.s32 %s272, 1
      %p276 = scmp.eq.s32.totalorder %s34, 1
      %p277 = scmp.ne.s32.totalorder %s272, %s274
      %p278 = scmp.eq.s32.totalorder %s34, 0
      %p279 = por %p277, %p278
      %p280 = scmp.ne.s32.totalorder %s272, %s274
      %p281 = scmp.eq.s32.totalorder %s39, 1
      %p282 = por %p280, %p281
      %p283 = scmp.ne.s32.totalorder %s274, %s275
      %p284 = scmp.eq.s32.totalorder %s39, 0
      %p285 = por %p283, %p284
      %p286 = scmp.ne.s32.totalorder %s274, %s275
      %p287 = scmp.eq.s32.totalorder %s40, 1
      %p288 = por %p286, %p287
      %p290 = scmp.ne.s32.totalorder %s275, %s289
      %p291 = scmp.eq.s32.totalorder %s40, 0
      %p292 = por %p290, %p291
      %s294 = sadd.s32 %s293, 1
      %p297 = scmp.eq.s32.totalorder %s34, 1
      %p298 = scmp.ne.s32.totalorder %s293, %s295
      %p299 = scmp.eq.s32.totalorder %s34, 0
      %p300 = por %p298, %p299
      %p301 = scmp.ne.s32.totalorder %s293, %s295
      %p302 = scmp.eq.s32.totalorder %s39, 1
      %p303 = por %p301, %p302
      %p304 = scmp.ne.s32.totalorder %s295, %s296
      %p305 = scmp.eq.s32.totalorder %s39, 0
      %p306 = por %p304, %p305
      %p307 = scmp.ne.s32.totalorder %s295, %s296
      %p308 = scmp.eq.s32.totalorder %s40, 1
      %p309 = por %p307, %p308
      %p311 = scmp.ne.s32.totalorder %s296, %s310
      %p312 = scmp.eq.s32.totalorder %s40, 0
      %p313 = por %p311, %p312
      %s315 = sadd.s32 %s314, 1
      %p318 = scmp.eq.s32.totalorder %s34, 1
      %p319 = scmp.ne.s32.totalorder %s314, %s316
      %p320 = scmp.eq.s32.totalorder %s34, 0
      %p321 = por %p319, %p320
      %p322 = scmp.ne.s32.totalorder %s314, %s316
      %p323 = scmp.eq.s32.totalorder %s39, 1
      %p324 = por %p322, %p323
      %p325 = scmp.ne.s32.totalorder %s316, %s317
      %p326 = scmp.eq.s32.totalorder %s39, 0
      %p327 = por %p325, %p326
      %p328 = scmp.ne.s32.totalorder %s316, %s317
      %p329 = scmp.eq.s32.totalorder %s40, 1
      %p330 = por %p328, %p329
      %p332 = scmp.ne.s32.totalorder %s317, %s331
      %p333 = scmp.eq.s32.totalorder %s40, 0
      %p334 = por %p332, %p333
      %s336 = sadd.s32 %s335, 1
      %p339 = scmp.eq.s32.totalorder %s34, 1
      %p340 = scmp.ne.s32.totalorder %s335, %s337
      %p341 = scmp.eq.s32.totalorder %s34, 0
      %p342 = por %p340, %p341
      %p343 = scmp.ne.s32.totalorder %s335, %s337
      %p344 = scmp.eq.s32.totalorder %s39, 1
      %p345 = por %p343, %p344
      %p346 = scmp.ne.s32.totalorder %s337, %s338
      %p347 = scmp.eq.s32.totalorder %s39, 0
      %p348 = por %p346, %p347
      %p349 = scmp.ne.s32.totalorder %s337, %s338
      %p350 = scmp.eq.s32.totalorder %s40, 1
      %p351 = por %p349, %p350
      %p353 = scmp.ne.s32.totalorder %s338, %s352
      %p354 = scmp.eq.s32.totalorder %s40, 0
      %p355 = por %p353, %p354
      %s357 = sadd.s32 %s356, 1
      %p360 = scmp.eq.s32.totalorder %s34, 1
      %p361 = scmp.ne.s32.totalorder %s356, %s358
      %p362 = scmp.eq.s32.totalorder %s34, 0
      %p363 = por %p361, %p362
      %p364 = scmp.ne.s32.totalorder %s356, %s358
      %p365 = scmp.eq.s32.totalorder %s39, 1
      %p366 = por %p364, %p365
      %p367 = scmp.ne.s32.totalorder %s358, %s359
      %p368 = scmp.eq.s32.totalorder %s39, 0
      %p369 = por %p367, %p368
      %p370 = scmp.ne.s32.totalorder %s358, %s359
      %p371 = scmp.eq.s32.totalorder %s40, 1
      %p372 = por %p370, %p371
      %p374 = scmp.ne.s32.totalorder %s359, %s373
      %p375 = scmp.eq.s32.totalorder %s40, 0
      %p376 = por %p374, %p375
      %s378 = sadd.s32 %s377, 1
      %p381 = scmp.eq.s32.totalorder %s34, 1
      %p382 = scmp.ne.s32.totalorder %s377, %s379
      %p383 = scmp.eq.s32.totalorder %s34, 0
      %p384 = por %p382, %p383
      %p385 = scmp.ne.s32.totalorder %s377, %s379
      %p386 = scmp.eq.s32.totalorder %s39, 1
      %p387 = por %p385, %p386
      %p388 = scmp.ne.s32.totalorder %s379, %s380
      %p389 = scmp.eq.s32.totalorder %s39, 0
      %p390 = por %p388, %p389
      %p391 = scmp.ne.s32.totalorder %s379, %s380
      %p392 = scmp.eq.s32.totalorder %s40, 1
      %p393 = por %p391, %p392
      %p395 = scmp.ne.s32.totalorder %s380, %s394
      %p396 = scmp.eq.s32.totalorder %s40, 0
      %p397 = por %p395, %p396
      %s399 = sadd.s32 %s398, 1
      %p402 = scmp.eq.s32.totalorder %s34, 1
      %p403 = scmp.ne.s32.totalorder %s398, %s400
      %p404 = scmp.eq.s32.totalorder %s34, 0
      %p405 = por %p403, %p404
      %p406 = scmp.ne.s32.totalorder %s398, %s400
      %p407 = scmp.eq.s32.totalorder %s39, 1
      %p408 = por %p406, %p407
      %p409 = scmp.ne.s32.totalorder %s400, %s401
      %p410 = scmp.eq.s32.totalorder %s39, 0
      %p411 = por %p409, %p410
      %p412 = scmp.ne.s32.totalorder %s400, %s401
      %p413 = scmp.eq.s32.totalorder %s40, 1
      %p414 = por %p412, %p413
      %p416 = scmp.ne.s32.totalorder %s401, %s415
      %p417 = scmp.eq.s32.totalorder %s40, 0
      %p418 = por %p416, %p417
      %s420 = sadd.s32 %s419, 1
      %p423 = scmp.eq.s32.totalorder %s34, 1
      %p424 = scmp.ne.s32.totalorder %s419, %s421
      %p425 = scmp.eq.s32.totalorder %s34, 0
      %p426 = por %p424, %p425
      %p427 = scmp.ne.s32.totalorder %s419, %s421
      %p428 = scmp.eq.s32.totalorder %s39, 1
      %p429 = por %p427, %p428
      %p430 = scmp.ne.s32.totalorder %s421, %s422
      %p431 = scmp.eq.s32.totalorder %s39, 0
      %p432 = por %p430, %p431
      %p433 = scmp.ne.s32.totalorder %s421, %s422
      %p434 = scmp.eq.s32.totalorder %s40, 1
      %p435 = por %p433, %p434
      %p437 = scmp.ne.s32.totalorder %s422, %s436
      %p438 = scmp.eq.s32.totalorder %s40, 0
      %p439 = por %p437, %p438
      %s441 = sadd.s32 %s440, 1
      %p444 = scmp.eq.s32.totalorder %s34, 1
      %p445 = scmp.ne.s32.totalorder %s440, %s442
      %p446 = scmp.eq.s32.totalorder %s34, 0
      %p447 = por %p445, %p446
      %p448 = scmp.ne.s32.totalorder %s440, %s442
      %p449 = scmp.eq.s32.totalorder %s39, 1
      %p450 = por %p448, %p449
      %p451 = scmp.ne.s32.totalorder %s442, %s443
      %p452 = scmp.eq.s32.totalorder %s39, 0
      %p453 = por %p451, %p452
      %p454 = scmp.ne.s32.totalorder %s442, %s443
      %p455 = scmp.eq.s32.totalorder %s40, 1
      %p456 = por %p454, %p455
      %p458 = scmp.ne.s32.totalorder %s443, %s457
      %p459 = scmp.eq.s32.totalorder %s40, 0
      %p460 = por %p458, %p459
      %s462 = sadd.s32 %s461, 1
      %p465 = scmp.eq.s32.totalorder %s34, 1
      %p466 = scmp.ne.s32.totalorder %s461, %s463
      %p467 = scmp.eq.s32.totalorder %s34, 0
      %p468 = por %p466, %p467
      %p469 = scmp.ne.s32.totalorder %s461, %s463
      %p470 = scmp.eq.s32.totalorder %s39, 1
      %p471 = por %p469, %p470
      %p472 = scmp.ne.s32.totalorder %s463, %s464
      %p473 = scmp.eq.s32.totalorder %s39, 0
      %p474 = por %p472, %p473
      %p475 = scmp.ne.s32.totalorder %s463, %s464
      %p476 = scmp.eq.s32.totalorder %s40, 1
      %p477 = por %p475, %p476
      %p479 = scmp.ne.s32.totalorder %s464, %s478
      %p480 = scmp.eq.s32.totalorder %s40, 0
      %p481 = por %p479, %p480
      %s482 = ssub.s32 %s34, %s41
      %p483 = scmp.eq.s32.totalorder %s482, 0
      %s485 = sadd.s32 %s484, 1
      %s486 = scalar_select %p483, %s484, %s485
      %p489 = pneg %p483
      %p490 = scmp.eq.s32.totalorder %s34, 1
      %p491 = por %p489, %p490
      %p492 = scmp.ne.s32.totalorder %s484, %s487
      %p493 = scmp.eq.s32.totalorder %s34, 0
      %p494 = por %p492, %p493
      %p495 = scmp.ne.s32.totalorder %s484, %s487
      %p496 = scmp.eq.s32.totalorder %s39, 1
      %p497 = por %p495, %p496
      %p498 = scmp.ne.s32.totalorder %s487, %s488
      %p499 = scmp.eq.s32.totalorder %s39, 0
      %p500 = por %p498, %p499
      %p501 = scmp.ne.s32.totalorder %s487, %s488
      %p502 = scmp.eq.s32.totalorder %s40, 1
      %p503 = por %p501, %p502
      %p505 = scmp.ne.s32.totalorder %s488, %s504
      %p506 = scmp.eq.s32.totalorder %s40, 0
      %p507 = por %p505, %p506
      %s508 = ssub.s32 %s34, %s41
      %p509 = scmp.eq.s32.totalorder %s508, 0
      %s511 = sadd.s32 %s510, 1
      %s512 = scalar_select %p509, %s510, %s511
      %p515 = pneg %p509
      %p516 = scmp.eq.s32.totalorder %s34, 1
      %p517 = por %p515, %p516
      %p518 = scmp.ne.s32.totalorder %s510, %s513
      %p519 = scmp.eq.s32.totalorder %s34, 0
      %p520 = por %p518, %p519
      %p521 = scmp.ne.s32.totalorder %s510, %s513
      %p522 = scmp.eq.s32.totalorder %s39, 1
      %p523 = por %p521, %p522
      %p524 = scmp.ne.s32.totalorder %s513, %s514
      %p525 = scmp.eq.s32.totalorder %s39, 0
      %p526 = por %p524, %p525
      %p527 = scmp.ne.s32.totalorder %s513, %s514
      %p528 = scmp.eq.s32.totalorder %s40, 1
      %p529 = por %p527, %p528
      %p531 = scmp.ne.s32.totalorder %s514, %s530
      %p532 = scmp.eq.s32.totalorder %s40, 0
      %p533 = por %p531, %p532
      %p534 = scmp.le.s32.totalorder 1, %s34
      %p535 = scmp.lt.s32.totalorder %s34, 3
      %p536 = pnand %p534, %p535
      %p537 = pneg %p536
      // Predicated region
      $region9: #{tpu_custom_call.1} parent=5 // pred_check
        _
      $region10: #{tpu_custom_call.1} parent=5 // pred_check_branch
        %539 = sbr.rel (%p536) target = $region12
      $region11: #{tpu_custom_call.1} parent=5 // pred_region
        %s540 = ssub.s32 %s34, 1
        // Predicated region
        $region13: #{tpu_custom_call.1} parent=11 // pred_check
          %p541 = pneg %p159
        $region14: #{tpu_custom_call.1} parent=11 // pred_check_branch
          %543 = sbr.rel (%p541) target = $region16
        $region15: #{tpu_custom_call.1} parent=11 // pred_region
          _
        $region16: #{tpu_custom_call.1} parent=11 // pred_fallthru
          _
        // Predicated region
        $region17: #{tpu_custom_call.1} parent=11 // pred_check
          %p544 = pneg %p180
        $region18: #{tpu_custom_call.1} parent=11 // pred_check_branch
          %546 = sbr.rel (%p544) target = $region20
        $region19: #{tpu_custom_call.1} parent=11 // pred_region
          _
        $region20: #{tpu_custom_call.1} parent=11 // pred_fallthru
          _
        // Predicated region
        $region21: #{tpu_custom_call.1} parent=11 // pred_check
          %p547 = pneg %p201
        $region22: #{tpu_custom_call.1} parent=11 // pred_check_branch
          %549 = sbr.rel (%p547) target = $region24
        $region23: #{tpu_custom_call.1} parent=11 // pred_region
          _
        $region24: #{tpu_custom_call.1} parent=11 // pred_fallthru
          _
        // Predicated region
        $region25: #{tpu_custom_call.1} parent=11 // pred_check
          %p550 = pneg %p222
        $region26: #{tpu_custom_call.1} parent=11 // pred_check_branch
          %552 = sbr.rel (%p550) target = $region28
        $region27: #{tpu_custom_call.1} parent=11 // pred_region
          _
        $region28: #{tpu_custom_call.1} parent=11 // pred_fallthru
          _
        // Predicated region
        $region29: #{tpu_custom_call.1} parent=11 // pred_check
          %p553 = pneg %p243
        $region30: #{tpu_custom_call.1} parent=11 // pred_check_branch
          %555 = sbr.rel (%p553) target = $region32
        $region31: #{tpu_custom_call.1} parent=11 // pred_region
          _
        $region32: #{tpu_custom_call.1} parent=11 // pred_fallthru
          _
        // Predicated region
        $region33: #{tpu_custom_call.1} parent=11 // pred_check
          %p556 = pneg %p264
        $region34: #{tpu_custom_call.1} parent=11 // pred_check_branch
          %558 = sbr.rel (%p556) target = $region36
        $region35: #{tpu_custom_call.1} parent=11 // pred_region
          _
        $region36: #{tpu_custom_call.1} parent=11 // pred_fallthru
          _
        // Predicated region
        $region37: #{tpu_custom_call.1} parent=11 // pred_check
          %p559 = pneg %p285
        $region38: #{tpu_custom_call.1} parent=11 // pred_check_branch
          %561 = sbr.rel (%p559) target = $region40
        $region39: #{tpu_custom_call.1} parent=11 // pred_region
          _
        $region40: #{tpu_custom_call.1} parent=11 // pred_fallthru
          _
        // Predicated region
        $region41: #{tpu_custom_call.1} parent=11 // pred_check
          %p562 = pneg %p306
        $region42: #{tpu_custom_call.1} parent=11 // pred_check_branch
          %564 = sbr.rel (%p562) target = $region44
        $region43: #{tpu_custom_call.1} parent=11 // pred_region
          _
        $region44: #{tpu_custom_call.1} parent=11 // pred_fallthru
          _
        // Predicated region
        $region45: #{tpu_custom_call.1} parent=11 // pred_check
          %p565 = pneg %p327
        $region46: #{tpu_custom_call.1} parent=11 // pred_check_branch
          %567 = sbr.rel (%p565) target = $region48
        $region47: #{tpu_custom_call.1} parent=11 // pred_region
          _
        $region48: #{tpu_custom_call.1} parent=11 // pred_fallthru
          _
        // Predicated region
        $region49: #{tpu_custom_call.1} parent=11 // pred_check
          %p568 = pneg %p348
        $region50: #{tpu_custom_call.1} parent=11 // pred_check_branch
          %570 = sbr.rel (%p568) target = $region52
        $region51: #{tpu_custom_call.1} parent=11 // pred_region
          _
        $region52: #{tpu_custom_call.1} parent=11 // pred_fallthru
          _
        // Predicated region
        $region53: #{tpu_custom_call.1} parent=11 // pred_check
          %p571 = pneg %p369
        $region54: #{tpu_custom_call.1} parent=11 // pred_check_branch
          %573 = sbr.rel (%p571) target = $region56
        $region55: #{tpu_custom_call.1} parent=11 // pred_region
          _
        $region56: #{tpu_custom_call.1} parent=11 // pred_fallthru
          _
        // Predicated region
        $region57: #{tpu_custom_call.1} parent=11 // pred_check
          %p574 = pneg %p390
        $region58: #{tpu_custom_call.1} parent=11 // pred_check_branch
          %576 = sbr.rel (%p574) target = $region60
        $region59: #{tpu_custom_call.1} parent=11 // pred_region
          _
        $region60: #{tpu_custom_call.1} parent=11 // pred_fallthru
          _
        // Predicated region
        $region61: #{tpu_custom_call.1} parent=11 // pred_check
          %p577 = pneg %p411
        $region62: #{tpu_custom_call.1} parent=11 // pred_check_branch
          %579 = sbr.rel (%p577) target = $region64
        $region63: #{tpu_custom_call.1} parent=11 // pred_region
          _
        $region64: #{tpu_custom_call.1} parent=11 // pred_fallthru
          _
        // Predicated region
        $region65: #{tpu_custom_call.1} parent=11 // pred_check
          %p580 = pneg %p432
        $region66: #{tpu_custom_call.1} parent=11 // pred_check_branch
          %582 = sbr.rel (%p580) target = $region68
        $region67: #{tpu_custom_call.1} parent=11 // pred_region
          _
        $region68: #{tpu_custom_call.1} parent=11 // pred_fallthru
          _
        // Predicated region
        $region69: #{tpu_custom_call.1} parent=11 // pred_check
          %p583 = pneg %p453
        $region70: #{tpu_custom_call.1} parent=11 // pred_check_branch
          %585 = sbr.rel (%p583) target = $region72
        $region71: #{tpu_custom_call.1} parent=11 // pred_region
          _
        $region72: #{tpu_custom_call.1} parent=11 // pred_fallthru
          _
        // Predicated region
        $region73: #{tpu_custom_call.1} parent=11 // pred_check
          %p586 = pneg %p474
        $region74: #{tpu_custom_call.1} parent=11 // pred_check_branch
          %588 = sbr.rel (%p586) target = $region76
        $region75: #{tpu_custom_call.1} parent=11 // pred_region
          _
        $region76: #{tpu_custom_call.1} parent=11 // pred_fallthru
          _
      $region12: #{tpu_custom_call.1} parent=5 // pred_fallthru
        _
      %p589 = scmp.lt.s32.totalorder %s34, 2
      // Predicated region
      $region77: #{tpu_custom_call.1} parent=5 // pred_check
        %p590 = pneg %p589
      $region78: #{tpu_custom_call.1} parent=5 // pred_check_branch
        %592 = sbr.rel (%p590) target = $region80
      $region79: #{tpu_custom_call.1} parent=5 // pred_region
        // Predicated region
        $region81: #{tpu_custom_call.1} parent=79 // pred_check
          %p593 = pneg %p54
        $region82: #{tpu_custom_call.1} parent=79 // pred_check_branch
          %595 = sbr.rel (%p593) target = $region84
        $region83: #{tpu_custom_call.1} parent=79 // pred_region
          %p596 = scmp.lt.s32.totalorder %s34, 1
          %s597 = scalar_select %p596, %s34, 1
          %s598 = smul.addr %s597, 4
          %s599 = smul.addr %s598, 8
          %s600 = scalar_lea.vmem %s0, %s599
        $region84: #{tpu_custom_call.1} parent=79 // pred_fallthru
          _
        // Predicated region
        $region85: #{tpu_custom_call.1} parent=79 // pred_check
          %p601 = pneg %p80
        $region86: #{tpu_custom_call.1} parent=79 // pred_check_branch
          %603 = sbr.rel (%p601) target = $region88
        $region87: #{tpu_custom_call.1} parent=79 // pred_region
          %p604 = scmp.lt.s32.totalorder %s34, 1
          %s605 = scalar_select %p604, %s34, 1
          %s606 = smul.addr %s605, 4
          %s607 = smul.addr %s606, 8
          %s608 = scalar_lea.vmem %s1, %s607
        $region88: #{tpu_custom_call.1} parent=79 // pred_fallthru
          _
        // Predicated region
        $region89: #{tpu_custom_call.1} parent=79 // pred_check
          %p609 = pneg %p106
        $region90: #{tpu_custom_call.1} parent=79 // pred_check_branch
          %611 = sbr.rel (%p609) target = $region92
        $region91: #{tpu_custom_call.1} parent=79 // pred_region
          %p612 = scmp.lt.s32.totalorder %s34, 1
          %s613 = scalar_select %p612, %s34, 1
          %s614 = smul.addr %s613, 4
          %s615 = smul.addr %s614, 8
          %s616 = scalar_lea.vmem %s2, %s615
        $region92: #{tpu_custom_call.1} parent=79 // pred_fallthru
          _
        // Predicated region
        $region93: #{tpu_custom_call.1} parent=79 // pred_check
          %p617 = pneg %p132
        $region94: #{tpu_custom_call.1} parent=79 // pred_check_branch
          %619 = sbr.rel (%p617) target = $region96
        $region95: #{tpu_custom_call.1} parent=79 // pred_region
          %p620 = scmp.lt.s32.totalorder %s34, 1
          %s621 = scalar_select %p620, %s34, 1
          %s622 = smul.addr %s621, 2
          %s623 = smul.addr %s622, 8
          %s624 = scalar_lea.vmem %s3, %s623
        $region96: #{tpu_custom_call.1} parent=79 // pred_fallthru
          _
      $region80: #{tpu_custom_call.1} parent=5 // pred_fallthru
        _
      %p625 = scmp.le.s32.totalorder 1, %s34
      %p626 = scmp.lt.s32.totalorder %s34, 3
      %p627 = pnand %p625, %p626
      %p628 = pneg %p627
      // Predicated region
      $region97: #{tpu_custom_call.1} parent=5 // pred_check
        _
      $region98: #{tpu_custom_call.1} parent=5 // pred_check_branch
        %630 = sbr.rel (%p627) target = $region100
      $region99: #{tpu_custom_call.1} parent=5 // pred_region
        %s631 = ssub.s32 %s34, 1
        %p632 = scmp.lt.s32.totalorder %s39, 1
        %s633 = scalar_select %p632, %s39, 1
        %s634 = smul.addr %s633, 4
        %s635 = smul.addr %s634, 8
        %s636 = scalar_lea.vmem %s0, %s635
        %p637 = pneg %p60
        %p638 = pneg %p57
        %p639 = scmp.lt.s32.totalorder %s39, 1
        %s640 = scalar_select %p639, %s39, 1
        %s641 = smul.addr %s640, 4
        %s642 = smul.addr %s641, 8
        %s643 = scalar_lea.vmem %s1, %s642
        %p644 = pneg %p86
        %p645 = pneg %p83
        %p646 = scmp.lt.s32.totalorder %s39, 1
        %s647 = scalar_select %p646, %s39, 1
        %s648 = smul.addr %s647, 4
        %s649 = smul.addr %s648, 8
        %s650 = scalar_lea.vmem %s2, %s649
        %p651 = pneg %p112
        %p652 = pneg %p109
        %p653 = scmp.lt.s32.totalorder %s39, 1
        %s654 = scalar_select %p653, %s39, 1
        %s655 = smul.addr %s654, 2
        %s656 = smul.addr %s655, 8
        %s657 = scalar_lea.vmem %s3, %s656
        %p658 = pneg %p138
        %p659 = pneg %p135
        %p660 = pneg %p159
        %p661 = pneg %p156
        %p662 = pneg %p180
        %p663 = pneg %p177
        %p664 = pneg %p201
        %p665 = pneg %p198
        %p666 = pneg %p222
        %p667 = pneg %p219
        %p668 = pneg %p243
        %p669 = pneg %p240
        %p670 = pneg %p264
        %p671 = pneg %p261
        %p672 = pneg %p285
        %p673 = pneg %p282
        %p674 = pneg %p306
        %p675 = pneg %p303
        %p676 = pneg %p327
        %p677 = pneg %p324
        %p678 = pneg %p348
        %p679 = pneg %p345
        %p680 = pneg %p369
        %p681 = pneg %p366
        %p682 = pneg %p390
        %p683 = pneg %p387
        %p684 = pneg %p411
        %p685 = pneg %p408
        %p686 = pneg %p432
        %p687 = pneg %p429
        %p688 = pneg %p453
        %p689 = pneg %p450
        %p690 = pneg %p474
        %p691 = pneg %p471
        %p692 = pneg %p500
        %p693 = pneg %p497
        %s694 = sand.u32 %s487, 1
        %s695 = scalar_lea.sflag [#allocation3], %s694
        %s696 = sand.u32 %s487, 1
        %s697 = smul.addr %s696, 32
        %s698 = scalar_lea.vmem [#allocation2], %s697
        %p699 = pneg %p526
        %p700 = pneg %p523
        %s701 = sand.u32 %s513, 1
        %s702 = scalar_lea.sflag [#allocation5], %s701
        %s703 = sand.u32 %s513, 1
        %s704 = smul.addr %s703, 32
        %s705 = scalar_lea.vmem [#allocation4], %s704
        %p706 = scmp.lt.s32.totalorder %s39, 1
        %s707 = scalar_select %p706, %s39, 1
        %s708 = smul.addr %s707, 4
        %s709 = smul.addr %s708, 8
        %s710 = scalar_lea.vmem %s0, %s709
        %p711 = scmp.lt.s32.totalorder %s39, 1
        %s712 = scalar_select %p711, %s39, 1
        %s713 = smul.addr %s712, 4
        %s714 = smul.addr %s713, 8
        %s715 = scalar_lea.vmem %s1, %s714
        %p716 = scmp.lt.s32.totalorder %s39, 1
        %s717 = scalar_select %p716, %s39, 1
        %s718 = smul.addr %s717, 4
        %s719 = smul.addr %s718, 8
        %s720 = scalar_lea.vmem %s2, %s719
        %p721 = scmp.lt.s32.totalorder %s39, 1
        %s722 = scalar_select %p721, %s39, 1
        %s723 = smul.addr %s722, 2
        %s724 = smul.addr %s723, 8
        %s725 = scalar_lea.vmem %s3, %s724
        %v726 = vld [vmem:[%s710] sm:$0xff]
        %v727 = vld [vmem:[%s710 + $0x8] sm:$0xff]
        %v728 = vld [vmem:[%s710 + $0x10] sm:$0xff]
        %v729 = vld [vmem:[%s710 + $0x18] sm:$0xff]
        %v730 = vld [vmem:[%s715] sm:$0xff]
        %v731 = vld [vmem:[%s715 + $0x8] sm:$0xff]
        %v732 = vld [vmem:[%s715 + $0x10] sm:$0xff]
        %v733 = vld [vmem:[%s715 + $0x18] sm:$0xff]
        %v734 = vld [vmem:[%s720] sm:$0xff]
        %v735 = vld [vmem:[%s720 + $0x8] sm:$0xff]
        %v736 = vld [vmem:[%s720 + $0x10] sm:$0xff]
        %v737 = vld [vmem:[%s720 + $0x18] sm:$0xff]
        %v738 = vld [vmem:[%s725] sm:$0xff]
        %v739 = vld [vmem:[%s725 + $0x8] sm:$0xff]
        %v740 = vld [vmem:[%s4] sm:$0xff]
        %v741 = vld [vmem:[%s4 + $0x8] sm:$0xff]
        %v742 = vld [vmem:[%s5] sm:$0xff]
        %v743 = vld [vmem:[%s5 + $0x8] sm:$0xff]
        %vm744 = vcmask 130048
        %v746 = vsel %vm744, %v740, 0
        %v749 = vsel %vm744, %v741, 0
        %751 = vmatprep.subr.mxu0 0.0
        %752 = vmatpush1.msra.mxu0 %v738
        %753 = vmatprep.subr.mxu0 0.0
        %754 = vmatpush1.msra.mxu0 %v739
        %755 = vmatprep.subr.mxu0 0.0
        %756 = vmatpush1.msra.mxu0 0.0
        %757 = vmatprep.subr.mxu0 0.0
        %758 = vmatpush1.msra.mxu0 0.0
        %759 = vmatprep.subr.mxu0 0.0
        %760 = vmatpush1.msra.mxu0 0.0
        %761 = vmatprep.subr.mxu0 0.0
        %762 = vmatpush1.msra.mxu0 0.0
        %763 = vmatprep.subr.mxu0 0.0
        %764 = vmatpush1.msra.mxu0 0.0
        %765 = vmatprep.subr.mxu0 0.0
        %766 = vmatpush1.msra.mxu0 0.0
        %767 = vmatprep.subr.mxu0 0.0
        %768 = vmatpush1.msra.mxu0 0.0
        %769 = vmatprep.subr.mxu0 0.0
        %770 = vmatpush1.msra.mxu0 0.0
        %771 = vmatprep.subr.mxu0 0.0
        %772 = vmatpush1.msra.mxu0 0.0
        %773 = vmatprep.subr.mxu0 0.0
        %774 = vmatpush1.msra.mxu0 0.0
        %775 = vmatprep.subr.mxu0 0.0
        %776 = vmatpush1.msra.mxu0 0.0
        %777 = vmatprep.subr.mxu0 0.0
        %778 = vmatpush1.msra.mxu0 0.0
        %779 = vmatprep.subr.mxu0 0.0
        %780 = vmatpush1.msra.mxu0 0.0
        %781 = vmatprep.subr.mxu0 0.0
        %782 = vmatpush1.msra.mxu0 0.0
        %783 = vmatprep.subr.mxu0 0.0
        %784 = vmatpush1.msra.mxu0 0.0
        %785 = vmatprep.subr.mxu0 0.0
        %786 = vmatpush1.msra.mxu0 0.0
        %787 = vmatprep.subr.mxu0 0.0
        %788 = vmatpush1.msra.mxu0 0.0
        %789 = vmatprep.subr.mxu0 0.0
        %790 = vmatpush1.msra.mxu0 0.0
        %791 = vmatprep.subr.mxu0 0.0
        %792 = vmatpush1.msra.mxu0 0.0
        %793 = vmatprep.subr.mxu0 0.0
        %794 = vmatpush1.msra.mxu0 0.0
        %795 = vmatprep.subr.mxu0 0.0
        %796 = vmatpush1.msra.mxu0 0.0
        %797 = vmatprep.subr.mxu0 0.0
        %798 = vmatpush1.msra.mxu0 0.0
        %799 = vmatprep.subr.mxu0 0.0
        %800 = vmatpush1.msra.mxu0 0.0
        %801 = vmatprep.subr.mxu0 0.0
        %802 = vmatpush1.msra.mxu0 0.0
        %803 = vmatprep.subr.mxu0 0.0
        %804 = vmatpush1.msra.mxu0 0.0
        %805 = vmatprep.subr.mxu0 0.0
        %806 = vmatpush1.msra.mxu0 0.0
        %807 = vmatprep.subr.mxu0 0.0
        %808 = vmatpush1.msra.mxu0 0.0
        %809 = vmatprep.subr.mxu0 0.0
        %810 = vmatpush1.msra.mxu0 0.0
        %811 = vmatprep.subr.mxu0 0.0
        %812 = vmatpush1.msra.mxu0 0.0
        %813 = vmatprep.subr.mxu0 0.0
        %814 = vmatpush1.msra.mxu0 0.0
        %815 = vmatprep.mubr.f32.mxu0 0.0
        %816 = vmatmul.mubr.f32.gmra.mrb[0].mxu0 %v746
        %v817 = vpop.f32.mrb[0].mxu0
        %v818 = vadd.f32 %v742, %v817
        %v819 = vpop.f32.mrb[0].mxu0
        %820 = vmatprep.mubr.f32.mxu0 0.0
        %821 = vmatmul.mubr.f32.gmra.mrb[0].mxu0 %v749
        %v822 = vpop.f32.mrb[0].mxu0
        %v823 = vadd.f32 %v743, %v822
        %v824 = vpop.f32.mrb[0].mxu0
        %825 = vdwg.mxu0
        %827 = vset.pattern.permute.xlu0 0
        %828 = vperm.xlu0 %827, %v818
        %v829 = vpop.permute.xlu0 %828
        %832 = vset.pattern.permute.xlu0 0
        %833 = vperm.xlu0 %832, %v823
        %v834 = vpop.permute.xlu0 %833
        %v836 = vadd.f32 %v726, %v829
        %v837 = vadd.f32 %v727, %v829
        %v838 = vadd.f32 %v728, %v834
        %v839 = vadd.f32 %v729, %v834
        %v840 = vlaneseq
        %v841 = vand.u32 %v840, 127
        %v842 = vadd.s32 %v841, 128
        %vm843 = vcmp.ge.s32.totalorder %v841, 4
        %vm844 = vcmp.ge.s32.totalorder %v842, 4
        %845 = vrot.lane.b32.xlu0 %v836, 4
        %v846 = vpop.permute.xlu0 %845
        %847 = vrot.lane.b32.xlu0 %v838, 4
        %v848 = vpop.permute.xlu0 %847
        %849 = vrot.lane.b32.xlu0 %v837, 4
        %v850 = vpop.permute.xlu0 %849
        %851 = vrot.lane.b32.xlu0 %v839, 4
        %v852 = vpop.permute.xlu0 %851
        %vm853 = vcmp.lt.s32.totalorder %v841, 4
        %v854 = vsel %vm853, %v846, %v850
        %v855 = vsel %vm853, %v848, %v852
        %v856 = vsel %vm853, %v850, %v846
        %v857 = vsel %vm853, %v852, %v848
        %v858 = vsel %vm843, 1, 0
        %v859 = vsel %vm844, 1, 0
        %vm860 = vcmp.eq.s32.totalorder %v858, 1
        %vm861 = vcmp.eq.s32.totalorder %v859, 1
        %v862 = vsel %vm860, %v856, 0.0
        %v863 = vsel %vm861, %v854, 0.0
        %v864 = vsel %vm860, %v857, 0.0
        %v865 = vsel %vm861, %v855, 0.0
        %vm866 = vcmp.lt.s32.totalorder %v841, 252
        %vm867 = vcmp.lt.s32.totalorder %v842, 252
        %868 = vrot.lane.b32.xlu0 %v836, 124
        %v869 = vpop.permute.xlu0 %868
        %870 = vrot.lane.b32.xlu0 %v838, 124
        %v871 = vpop.permute.xlu0 %870
        %872 = vrot.lane.b32.xlu0 %v837, 124
        %v873 = vpop.permute.xlu0 %872
        %874 = vrot.lane.b32.xlu0 %v839, 124
        %v875 = vpop.permute.xlu0 %874
        %vm876 = vcmp.lt.s32.totalorder %v841, 124
        %v877 = vsel %vm876, %v869, %v873
        %v878 = vsel %vm876, %v871, %v875
        %v879 = vsel %vm876, %v873, %v869
        %v880 = vsel %vm876, %v875, %v871
        %v881 = vsel %vm866, 1, 0
        %v882 = vsel %vm867, 1, 0
        %vm883 = vcmp.eq.s32.totalorder %v881, 1
        %vm884 = vcmp.eq.s32.totalorder %v882, 1
        %v885 = vsel %vm883, %v877, 0.0
        %v886 = vsel %vm884, %v879, 0.0
        %v887 = vsel %vm883, %v878, 0.0
        %v888 = vsel %vm884, %v880, 0.0
        %v889 = vld [vmem:[%s6] sm:$0xff]
        %v890 = vld [vmem:[%s6 + $0x8] sm:$0xff]
        %v891 = vld [vmem:[%s6 + $0x10] sm:$0xff]
        %v892 = vld [vmem:[%s6 + $0x18] sm:$0xff]
        %v893 = vld [vmem:[%s7] sm:$0xff]
        %v894 = vld [vmem:[%s7 + $0x8] sm:$0xff]
        %v895 = vld [vmem:[%s7 + $0x10] sm:$0xff]
        %v896 = vld [vmem:[%s7 + $0x18] sm:$0xff]
        %898 = vset.pattern.permute.xlu0 0
        %899 = vperm.xlu0 %898, %v893
        %v900 = vpop.permute.xlu0 %899
        %903 = vset.pattern.permute.xlu0 0
        %904 = vperm.xlu0 %903, %v894
        %v905 = vpop.permute.xlu0 %904
        %908 = vset.pattern.permute.xlu0 0
        %909 = vperm.xlu0 %908, %v895
        %v910 = vpop.permute.xlu0 %909
        %913 = vset.pattern.permute.xlu0 0
        %914 = vperm.xlu0 %913, %v896
        %v915 = vpop.permute.xlu0 %914
        %vm917 = vcmask 392192
        %v919 = vsel %vm917, %v889, 0
        %v922 = vsel %vm917, %v890, 0
        %v925 = vsel %vm917, %v891, 0
        %v928 = vsel %vm917, %v892, 0
        %930 = vmatprep.subr.mxu0 %v863
        %931 = vmatpush1.msra.mxu0 %v862
        %932 = vmatprep.subr.mxu0 %v865
        %933 = vmatpush1.msra.mxu0 %v864
        %934 = vmatprep.subr.mxu0 %v837
        %935 = vmatpush1.msra.mxu0 %v836
        %936 = vmatprep.subr.mxu0 %v839
        %937 = vmatpush1.msra.mxu0 %v838
        %938 = vmatprep.subr.mxu0 %v886
        %939 = vmatpush1.msra.mxu0 %v885
        %940 = vmatprep.subr.mxu0 %v888
        %941 = vmatpush1.msra.mxu0 %v887
        %942 = vmatprep.subr.mxu0 0.0
        %943 = vmatpush1.msra.mxu0 0.0
        %944 = vmatprep.subr.mxu0 0.0
        %945 = vmatpush1.msra.mxu0 0.0
        %946 = vmatprep.subr.mxu0 0.0
        %947 = vmatpush1.msra.mxu0 0.0
        %948 = vmatprep.subr.mxu0 0.0
        %949 = vmatpush1.msra.mxu0 0.0
        %950 = vmatprep.subr.mxu0 0.0
        %951 = vmatpush1.msra.mxu0 0.0
        %952 = vmatprep.subr.mxu0 0.0
        %953 = vmatpush1.msra.mxu0 0.0
        %954 = vmatprep.subr.mxu0 0.0
        %955 = vmatpush1.msra.mxu0 0.0
        %956 = vmatprep.subr.mxu0 0.0
        %957 = vmatpush1.msra.mxu0 0.0
        %958 = vmatprep.subr.mxu0 0.0
        %959 = vmatpush1.msra.mxu0 0.0
        %960 = vmatprep.subr.mxu0 0.0
        %961 = vmatpush1.msra.mxu0 0.0
        %962 = vmatprep.subr.mxu0 0.0
        %963 = vmatpush1.msra.mxu0 0.0
        %964 = vmatprep.subr.mxu0 0.0
        %965 = vmatpush1.msra.mxu0 0.0
        %966 = vmatprep.subr.mxu0 0.0
        %967 = vmatpush1.msra.mxu0 0.0
        %968 = vmatprep.subr.mxu0 0.0
        %969 = vmatpush1.msra.mxu0 0.0
        %970 = vmatprep.subr.mxu0 0.0
        %971 = vmatpush1.msra.mxu0 0.0
        %972 = vmatprep.subr.mxu0 0.0
        %973 = vmatpush1.msra.mxu0 0.0
        %974 = vmatprep.subr.mxu0 0.0
        %975 = vmatpush1.msra.mxu0 0.0
        %976 = vmatprep.subr.mxu0 0.0
        %977 = vmatpush1.msra.mxu0 0.0
        %978 = vmatprep.subr.mxu0 0.0
        %979 = vmatpush1.msra.mxu0 0.0
        %980 = vmatprep.subr.mxu0 0.0
        %981 = vmatpush1.msra.mxu0 0.0
        %982 = vmatprep.subr.mxu0 0.0
        %983 = vmatpush1.msra.mxu0 0.0
        %984 = vmatprep.subr.mxu0 0.0
        %985 = vmatpush1.msra.mxu0 0.0
        %986 = vmatprep.subr.mxu0 0.0
        %987 = vmatpush1.msra.mxu0 0.0
        %988 = vmatprep.subr.mxu0 0.0
        %989 = vmatpush1.msra.mxu0 0.0
        %990 = vmatprep.subr.mxu0 0.0
        %991 = vmatpush1.msra.mxu0 0.0
        %992 = vmatprep.subr.mxu0 0.0
        %993 = vmatpush1.msra.mxu0 0.0
        %994 = vmatprep.mubr.f32.mxu0 0.0
        %995 = vmatmul.mubr.f32.gmra.mrb[0].mxu0 %v919
        %v996 = vpop.f32.mrb[0].mxu0
        %v997 = vadd.f32 %v900, %v996
        %v998 = vpop.f32.mrb[0].mxu0
        %v999 = vadd.f32 %v900, %v998
        %1000 = vmatprep.mubr.f32.mxu0 0.0
        %1001 = vmatmul.mubr.f32.gmra.mrb[0].mxu0 %v922
        %v1002 = vpop.f32.mrb[0].mxu0
        %v1003 = vadd.f32 %v905, %v1002
        %v1004 = vpop.f32.mrb[0].mxu0
        %v1005 = vadd.f32 %v905, %v1004
        %1006 = vmatprep.mubr.f32.mxu0 0.0
        %1007 = vmatmul.mubr.f32.gmra.mrb[0].mxu0 %v925
        %v1008 = vpop.f32.mrb[0].mxu0
        %v1009 = vadd.f32 %v910, %v1008
        %v1010 = vpop.f32.mrb[0].mxu0
        %v1011 = vadd.f32 %v910, %v1010
        %1012 = vmatprep.mubr.f32.mxu0 0.0
        %1013 = vmatmul.mubr.f32.gmra.mrb[0].mxu0 %v928
        %v1014 = vpop.f32.mrb[0].mxu0
        %v1015 = vadd.f32 %v915, %v1014
        %v1016 = vpop.f32.mrb[0].mxu0
        %v1017 = vadd.f32 %v915, %v1016
        %1018 = vdwg.mxu0
        %v1019 = vadd.f32 %v997, %v999
        %1020 = vadd.xlane.f32.xlu0 %v1019
        %v1021 = vpop.xlane.xlu0 %1020
        %v1022 = vadd.f32 %v1003, %v1005
        %1023 = vadd.xlane.f32.xlu0 %v1022
        %v1024 = vpop.xlane.xlu0 %1023
        %v1025 = vadd.f32 %v1009, %v1011
        %1026 = vadd.xlane.f32.xlu0 %v1025
        %v1027 = vpop.xlane.xlu0 %1026
        %v1028 = vadd.f32 %v1015, %v1017
        %1029 = vadd.xlane.f32.xlu0 %v1028
        %v1030 = vpop.xlane.xlu0 %1029
        %v1031 = vrcp.pop 256.0
        %v1032 = vmul.f32 %v1021, %v1031
        %v1033 = vmul.f32 %v1024, %v1031
        %v1034 = vmul.f32 %v1027, %v1031
        %v1035 = vmul.f32 %v1030, %v1031
        %v1036 = vsub.f32 %v997, %v1032
        %v1037 = vsub.f32 %v999, %v1032
        %v1038 = vsub.f32 %v1003, %v1033
        %v1039 = vsub.f32 %v1005, %v1033
        %v1040 = vsub.f32 %v1009, %v1034
        %v1041 = vsub.f32 %v1011, %v1034
        %v1042 = vsub.f32 %v1015, %v1035
        %v1043 = vsub.f32 %v1017, %v1035
        %v1044 = vmul.f32 %v1036, %v1036
        %v1045 = vmul.f32 %v1037, %v1037
        %v1046 = vmul.f32 %v1038, %v1038
        %v1047 = vmul.f32 %v1039, %v1039
        %v1048 = vmul.f32 %v1040, %v1040
        %v1049 = vmul.f32 %v1041, %v1041
        %v1050 = vmul.f32 %v1042, %v1042
        %v1051 = vmul.f32 %v1043, %v1043
        %v1052 = vadd.f32 %v1044, %v1045
        %1053 = vadd.xlane.f32.xlu0 %v1052
        %v1054 = vpop.xlane.xlu0 %1053
        %v1055 = vadd.f32 %v1046, %v1047
        %1056 = vadd.xlane.f32.xlu0 %v1055
        %v1057 = vpop.xlane.xlu0 %1056
        %v1058 = vadd.f32 %v1048, %v1049
        %1059 = vadd.xlane.f32.xlu0 %v1058
        %v1060 = vpop.xlane.xlu0 %1059
        %v1061 = vadd.f32 %v1050, %v1051
        %1062 = vadd.xlane.f32.xlu0 %v1061
        %v1063 = vpop.xlane.xlu0 %1062
        %v1064 = vmul.f32 %v1054, %v1031
        %v1065 = vmul.f32 %v1057, %v1031
        %v1066 = vmul.f32 %v1060, %v1031
        %v1067 = vmul.f32 %v1063, %v1031
        %v1068 = vadd.f32 %v1064, 1e-05
        %v1069 = vadd.f32 %v1065, 1e-05
        %v1070 = vadd.f32 %v1066, 1e-05
        %v1071 = vadd.f32 %v1067, 1e-05
        %v1072 = vrsqrt.pop %v1068
        %v1073 = vrsqrt.pop %v1069
        %v1074 = vrsqrt.pop %v1070
        %v1075 = vrsqrt.pop %v1071
        %v1076 = vmul.f32 %v1036, %v1072
        %v1077 = vmul.f32 %v1037, %v1072
        %v1078 = vmul.f32 %v1038, %v1073
        %v1079 = vmul.f32 %v1039, %v1073
        %v1080 = vmul.f32 %v1040, %v1074
        %v1081 = vmul.f32 %v1041, %v1074
        %v1082 = vmul.f32 %v1042, %v1075
        %v1083 = vmul.f32 %v1043, %v1075
        %v1084 = vld [vmem:[%s16] sm:$0xff]
        %v1085 = vld [vmem:[%s16 + $0x8] sm:$0xff]
        %v1086 = vld [vmem:[%s16 + $0x10] sm:$0xff]
        %v1087 = vld [vmem:[%s16 + $0x18] sm:$0xff]
        %1089 = vset.pattern.permute.xlu0 0
        %1090 = vperm.xlu0 %1089, %v1084
        %v1091 = vpop.permute.xlu0 %1090
        %1094 = vset.pattern.permute.xlu0 0
        %1095 = vperm.xlu0 %1094, %v1085
        %v1096 = vpop.permute.xlu0 %1095
        %1099 = vset.pattern.permute.xlu0 0
        %1100 = vperm.xlu0 %1099, %v1086
        %v1101 = vpop.permute.xlu0 %1100
        %1104 = vset.pattern.permute.xlu0 0
        %1105 = vperm.xlu0 %1104, %v1087
        %v1106 = vpop.permute.xlu0 %1105
        %v1108 = vmul.f32 %v1076, %v1091
        %v1109 = vmul.f32 %v1077, %v1091
        %v1110 = vmul.f32 %v1078, %v1096
        %v1111 = vmul.f32 %v1079, %v1096
        %v1112 = vmul.f32 %v1080, %v1101
        %v1113 = vmul.f32 %v1081, %v1101
        %v1114 = vmul.f32 %v1082, %v1106
        %v1115 = vmul.f32 %v1083, %v1106
        %v1116 = vld [vmem:[%s17] sm:$0xff]
        %v1117 = vld [vmem:[%s17 + $0x8] sm:$0xff]
        %v1118 = vld [vmem:[%s17 + $0x10] sm:$0xff]
        %v1119 = vld [vmem:[%s17 + $0x18] sm:$0xff]
        %1121 = vset.pattern.permute.xlu0 0
        %1122 = vperm.xlu0 %1121, %v1116
        %v1123 = vpop.permute.xlu0 %1122
        %1126 = vset.pattern.permute.xlu0 0
        %1127 = vperm.xlu0 %1126, %v1117
        %v1128 = vpop.permute.xlu0 %1127
        %1131 = vset.pattern.permute.xlu0 0
        %1132 = vperm.xlu0 %1131, %v1118
        %v1133 = vpop.permute.xlu0 %1132
        %1136 = vset.pattern.permute.xlu0 0
        %1137 = vperm.xlu0 %1136, %v1119
        %v1138 = vpop.permute.xlu0 %1137
        %v1140 = vadd.f32 %v1108, %v1123
        %v1141 = vadd.f32 %v1109, %v1123
        %v1142 = vadd.f32 %v1110, %v1128
        %v1143 = vadd.f32 %v1111, %v1128
        %v1144 = vadd.f32 %v1112, %v1133
        %v1145 = vadd.f32 %v1113, %v1133
        %v1146 = vadd.f32 %v1114, %v1138
        %v1147 = vadd.f32 %v1115, %v1138
        %v1148 = vld [vmem:[%s8] sm:$0xff]
        %v1149 = vld [vmem:[%s8 + $0x8] sm:$0xff]
        %v1150 = vld [vmem:[%s8 + $0x10] sm:$0xff]
        %v1151 = vld [vmem:[%s8 + $0x18] sm:$0xff]
        %v1152 = vld [vmem:[%s9] sm:$0xff]
        %v1153 = vld [vmem:[%s9 + $0x8] sm:$0xff]
        %v1154 = vld [vmem:[%s9 + $0x10] sm:$0xff]
        %v1155 = vld [vmem:[%s9 + $0x18] sm:$0xff]
        %1157 = vset.pattern.permute.xlu0 0
        %1158 = vperm.xlu0 %1157, %v1152
        %v1159 = vpop.permute.xlu0 %1158
        %1162 = vset.pattern.permute.xlu0 0
        %1163 = vperm.xlu0 %1162, %v1153
        %v1164 = vpop.permute.xlu0 %1163
        %1167 = vset.pattern.permute.xlu0 0
        %1168 = vperm.xlu0 %1167, %v1154
        %v1169 = vpop.permute.xlu0 %1168
        %1172 = vset.pattern.permute.xlu0 0
        %1173 = vperm.xlu0 %1172, %v1155
        %v1174 = vpop.permute.xlu0 %1173
        %v1177 = vsel %vm744, %v1148, 0
        %v1180 = vsel %vm744, %v1149, 0
        %v1183 = vsel %vm744, %v1150, 0
        %v1186 = vsel %vm744, %v1151, 0
        %1188 = vmatprep.subr.mxu0 %v735
        %1189 = vmatpush1.msra.mxu0 %v734
        %1190 = vmatprep.subr.mxu0 %v737
        %1191 = vmatpush1.msra.mxu0 %v736
        %1192 = vmatprep.subr.mxu0 0.0
        %1193 = vmatpush1.msra.mxu0 0.0
        %1194 = vmatprep.subr.mxu0 0.0
        %1195 = vmatpush1.msra.mxu0 0.0
        %1196 = vmatprep.subr.mxu0 0.0
        %1197 = vmatpush1.msra.mxu0 0.0
        %1198 = vmatprep.subr.mxu0 0.0
        %1199 = vmatpush1.msra.mxu0 0.0
        %1200 = vmatprep.subr.mxu0 0.0
        %1201 = vmatpush1.msra.mxu0 0.0
        %1202 = vmatprep.subr.mxu0 0.0
        %1203 = vmatpush1.msra.mxu0 0.0
        %1204 = vmatprep.subr.mxu0 0.0
        %1205 = vmatpush1.msra.mxu0 0.0
        %1206 = vmatprep.subr.mxu0 0.0
        %1207 = vmatpush1.msra.mxu0 0.0
        %1208 = vmatprep.subr.mxu0 0.0
        %1209 = vmatpush1.msra.mxu0 0.0
        %1210 = vmatprep.subr.mxu0 0.0
        %1211 = vmatpush1.msra.mxu0 0.0
        %1212 = vmatprep.subr.mxu0 0.0
        %1213 = vmatpush1.msra.mxu0 0.0
        %1214 = vmatprep.subr.mxu0 0.0
        %1215 = vmatpush1.msra.mxu0 0.0
        %1216 = vmatprep.subr.mxu0 0.0
        %1217 = vmatpush1.msra.mxu0 0.0
        %1218 = vmatprep.subr.mxu0 0.0
        %1219 = vmatpush1.msra.mxu0 0.0
        %1220 = vmatprep.subr.mxu0 0.0
        %1221 = vmatpush1.msra.mxu0 0.0
        %1222 = vmatprep.subr.mxu0 0.0
        %1223 = vmatpush1.msra.mxu0 0.0
        %1224 = vmatprep.subr.mxu0 0.0
        %1225 = vmatpush1.msra.mxu0 0.0
        %1226 = vmatprep.subr.mxu0 0.0
        %1227 = vmatpush1.msra.mxu0 0.0
        %1228 = vmatprep.subr.mxu0 0.0
        %1229 = vmatpush1.msra.mxu0 0.0
        %1230 = vmatprep.subr.mxu0 0.0
        %1231 = vmatpush1.msra.mxu0 0.0
        %1232 = vmatprep.subr.mxu0 0.0
        %1233 = vmatpush1.msra.mxu0 0.0
        %1234 = vmatprep.subr.mxu0 0.0
        %1235 = vmatpush1.msra.mxu0 0.0
        %1236 = vmatprep.subr.mxu0 0.0
        %1237 = vmatpush1.msra.mxu0 0.0
        %1238 = vmatprep.subr.mxu0 0.0
        %1239 = vmatpush1.msra.mxu0 0.0
        %1240 = vmatprep.subr.mxu0 0.0
        %1241 = vmatpush1.msra.mxu0 0.0
        %1242 = vmatprep.subr.mxu0 0.0
        %1243 = vmatpush1.msra.mxu0 0.0
        %1244 = vmatprep.subr.mxu0 0.0
        %1245 = vmatpush1.msra.mxu0 0.0
        %1246 = vmatprep.subr.mxu0 0.0
        %1247 = vmatpush1.msra.mxu0 0.0
        %1248 = vmatprep.subr.mxu0 0.0
        %1249 = vmatpush1.msra.mxu0 0.0
        %1250 = vmatprep.subr.mxu0 0.0
        %1251 = vmatpush1.msra.mxu0 0.0
        %1252 = vmatprep.mubr.f32.mxu0 0.0
        %1253 = vmatmul.mubr.f32.gmra.mrb[0].mxu0 %v1177
        %v1254 = vpop.f32.mrb[0].mxu0
        %v1255 = vadd.f32 %v1159, %v1254
        %v1256 = vpop.f32.mrb[0].mxu0
        %v1257 = vadd.f32 %v1159, %v1256
        %1258 = vmatprep.mubr.f32.mxu0 0.0
        %1259 = vmatmul.mubr.f32.gmra.mrb[0].mxu0 %v1180
        %v1260 = vpop.f32.mrb[0].mxu0
        %v1261 = vadd.f32 %v1164, %v1260
        %v1262 = vpop.f32.mrb[0].mxu0
        %v1263 = vadd.f32 %v1164, %v1262
        %1264 = vmatprep.mubr.f32.mxu0 0.0
        %1265 = vmatmul.mubr.f32.gmra.mrb[0].mxu0 %v1183
        %v1266 = vpop.f32.mrb[0].mxu0
        %v1267 = vadd.f32 %v1169, %v1266
        %v1268 = vpop.f32.mrb[0].mxu0
        %v1269 = vadd.f32 %v1169, %v1268
        %1270 = vmatprep.mubr.f32.mxu0 0.0
        %1271 = vmatmul.mubr.f32.gmra.mrb[0].mxu0 %v1186
        %v1272 = vpop.f32.mrb[0].mxu0
        %v1273 = vadd.f32 %v1174, %v1272
        %v1274 = vpop.f32.mrb[0].mxu0
        %v1275 = vadd.f32 %v1174, %v1274
        %1276 = vdwg.mxu0
        %v1277 = vadd.f32 %v1140, %v1255
        %v1278 = vadd.f32 %v1141, %v1257
        %v1279 = vadd.f32 %v1142, %v1261
        %v1280 = vadd.f32 %v1143, %v1263
        %v1281 = vadd.f32 %v1144, %v1267
        %v1282 = vadd.f32 %v1145, %v1269
        %v1283 = vadd.f32 %v1146, %v1273
        %v1284 = vadd.f32 %v1147, %v1275
        %v1285 = vld [vmem:[%s10] sm:$0xff]
        %v1286 = vld [vmem:[%s10 + $0x8] sm:$0xff]
        %v1287 = vld [vmem:[%s10 + $0x10] sm:$0xff]
        %v1288 = vld [vmem:[%s10 + $0x18] sm:$0xff]
        %v1289 = vld [vmem:[%s11] sm:$0xff]
        %v1290 = vld [vmem:[%s11 + $0x8] sm:$0xff]
        %v1291 = vld [vmem:[%s11 + $0x10] sm:$0xff]
        %v1292 = vld [vmem:[%s11 + $0x18] sm:$0xff]
        %1294 = vset.pattern.permute.xlu0 0
        %1295 = vperm.xlu0 %1294, %v1289
        %v1296 = vpop.permute.xlu0 %1295
        %1299 = vset.pattern.permute.xlu0 0
        %1300 = vperm.xlu0 %1299, %v1290
        %v1301 = vpop.permute.xlu0 %1300
        %1304 = vset.pattern.permute.xlu0 0
        %1305 = vperm.xlu0 %1304, %v1291
        %v1306 = vpop.permute.xlu0 %1305
        %1309 = vset.pattern.permute.xlu0 0
        %1310 = vperm.xlu0 %1309, %v1292
        %v1311 = vpop.permute.xlu0 %1310
        %vm1313 = vcmask 261120
        %v1315 = vsel %vm1313, %v1285, 0
        %v1318 = vsel %vm1313, %v1286, 0
        %v1321 = vsel %vm1313, %v1287, 0
        %v1324 = vsel %vm1313, %v1288, 0
        %1326 = vmatprep.subr.mxu0 %v1278
        %1327 = vmatpush1.msra.mxu0 %v1277
        %1328 = vmatprep.subr.mxu0 %v1280
        %1329 = vmatpush1.msra.mxu0 %v1279
        %1330 = vmatprep.subr.mxu0 %v1282
        %1331 = vmatpush1.msra.mxu0 %v1281
        %1332 = vmatprep.subr.mxu0 %v1284
        %1333 = vmatpush1.msra.mxu0 %v1283
        %1334 = vmatprep.subr.mxu0 0.0
        %1335 = vmatpush1.msra.mxu0 0.0
        %1336 = vmatprep.subr.mxu0 0.0
        %1337 = vmatpush1.msra.mxu0 0.0
        %1338 = vmatprep.subr.mxu0 0.0
        %1339 = vmatpush1.msra.mxu0 0.0
        %1340 = vmatprep.subr.mxu0 0.0
        %1341 = vmatpush1.msra.mxu0 0.0
        %1342 = vmatprep.subr.mxu0 0.0
        %1343 = vmatpush1.msra.mxu0 0.0
        %1344 = vmatprep.subr.mxu0 0.0
        %1345 = vmatpush1.msra.mxu0 0.0
        %1346 = vmatprep.subr.mxu0 0.0
        %1347 = vmatpush1.msra.mxu0 0.0
        %1348 = vmatprep.subr.mxu0 0.0
        %1349 = vmatpush1.msra.mxu0 0.0
        %1350 = vmatprep.subr.mxu0 0.0
        %1351 = vmatpush1.msra.mxu0 0.0
        %1352 = vmatprep.subr.mxu0 0.0
        %1353 = vmatpush1.msra.mxu0 0.0
        %1354 = vmatprep.subr.mxu0 0.0
        %1355 = vmatpush1.msra.mxu0 0.0
        %1356 = vmatprep.subr.mxu0 0.0
        %1357 = vmatpush1.msra.mxu0 0.0
        %1358 = vmatprep.subr.mxu0 0.0
        %1359 = vmatpush1.msra.mxu0 0.0
        %1360 = vmatprep.subr.mxu0 0.0
        %1361 = vmatpush1.msra.mxu0 0.0
        %1362 = vmatprep.subr.mxu0 0.0
        %1363 = vmatpush1.msra.mxu0 0.0
        %1364 = vmatprep.subr.mxu0 0.0
        %1365 = vmatpush1.msra.mxu0 0.0
        %1366 = vmatprep.subr.mxu0 0.0
        %1367 = vmatpush1.msra.mxu0 0.0
        %1368 = vmatprep.subr.mxu0 0.0
        %1369 = vmatpush1.msra.mxu0 0.0
        %1370 = vmatprep.subr.mxu0 0.0
        %1371 = vmatpush1.msra.mxu0 0.0
        %1372 = vmatprep.subr.mxu0 0.0
        %1373 = vmatpush1.msra.mxu0 0.0
        %1374 = vmatprep.subr.mxu0 0.0
        %1375 = vmatpush1.msra.mxu0 0.0
        %1376 = vmatprep.subr.mxu0 0.0
        %1377 = vmatpush1.msra.mxu0 0.0
        %1378 = vmatprep.subr.mxu0 0.0
        %1379 = vmatpush1.msra.mxu0 0.0
        %1380 = vmatprep.subr.mxu0 0.0
        %1381 = vmatpush1.msra.mxu0 0.0
        %1382 = vmatprep.subr.mxu0 0.0
        %1383 = vmatpush1.msra.mxu0 0.0
        %1384 = vmatprep.subr.mxu0 0.0
        %1385 = vmatpush1.msra.mxu0 0.0
        %1386 = vmatprep.subr.mxu0 0.0
        %1387 = vmatpush1.msra.mxu0 0.0
        %1388 = vmatprep.subr.mxu0 0.0
        %1389 = vmatpush1.msra.mxu0 0.0
        %1390 = vmatprep.mubr.f32.mxu0 0.0
        %1391 = vmatmul.mubr.f32.gmra.mrb[0].mxu0 %v1315
        %v1392 = vpop.f32.mrb[0].mxu0
        %v1393 = vadd.f32 %v1296, %v1392
        %v1394 = vpop.f32.mrb[0].mxu0
        %v1395 = vadd.f32 %v1296, %v1394
        %1396 = vmatprep.mubr.f32.mxu0 0.0
        %1397 = vmatmul.mubr.f32.gmra.mrb[0].mxu0 %v1318
        %v1398 = vpop.f32.mrb[0].mxu0
        %v1399 = vadd.f32 %v1301, %v1398
        %v1400 = vpop.f32.mrb[0].mxu0
        %v1401 = vadd.f32 %v1301, %v1400
        %1402 = vmatprep.mubr.f32.mxu0 0.0
        %1403 = vmatmul.mubr.f32.gmra.mrb[0].mxu0 %v1321
        %v1404 = vpop.f32.mrb[0].mxu0
        %v1405 = vadd.f32 %v1306, %v1404
        %v1406 = vpop.f32.mrb[0].mxu0
        %v1407 = vadd.f32 %v1306, %v1406
        %1408 = vmatprep.mubr.f32.mxu0 0.0
        %1409 = vmatmul.mubr.f32.gmra.mrb[0].mxu0 %v1324
        %v1410 = vpop.f32.mrb[0].mxu0
        %v1411 = vadd.f32 %v1311, %v1410
        %v1412 = vpop.f32.mrb[0].mxu0
        %v1413 = vadd.f32 %v1311, %v1412
        %1414 = vdwg.mxu0
        %v1415 = vadd.f32 %v1393, %v1395
        %1416 = vadd.xlane.f32.xlu0 %v1415
        %v1417 = vpop.xlane.xlu0 %1416
        %v1418 = vadd.f32 %v1399, %v1401
        %1419 = vadd.xlane.f32.xlu0 %v1418
        %v1420 = vpop.xlane.xlu0 %1419
        %v1421 = vadd.f32 %v1405, %v1407
        %1422 = vadd.xlane.f32.xlu0 %v1421
        %v1423 = vpop.xlane.xlu0 %1422
        %v1424 = vadd.f32 %v1411, %v1413
        %1425 = vadd.xlane.f32.xlu0 %v1424
        %v1426 = vpop.xlane.xlu0 %1425
        %v1427 = vmul.f32 %v1417, %v1031
        %v1428 = vmul.f32 %v1420, %v1031
        %v1429 = vmul.f32 %v1423, %v1031
        %v1430 = vmul.f32 %v1426, %v1031
        %v1431 = vsub.f32 %v1393, %v1427
        %v1432 = vsub.f32 %v1395, %v1427
        %v1433 = vsub.f32 %v1399, %v1428
        %v1434 = vsub.f32 %v1401, %v1428
        %v1435 = vsub.f32 %v1405, %v1429
        %v1436 = vsub.f32 %v1407, %v1429
        %v1437 = vsub.f32 %v1411, %v1430
        %v1438 = vsub.f32 %v1413, %v1430
        %v1439 = vmul.f32 %v1431, %v1431
        %v1440 = vmul.f32 %v1432, %v1432
        %v1441 = vmul.f32 %v1433, %v1433
        %v1442 = vmul.f32 %v1434, %v1434
        %v1443 = vmul.f32 %v1435, %v1435
        %v1444 = vmul.f32 %v1436, %v1436
        %v1445 = vmul.f32 %v1437, %v1437
        %v1446 = vmul.f32 %v1438, %v1438
        %v1447 = vadd.f32 %v1439, %v1440
        %1448 = vadd.xlane.f32.xlu0 %v1447
        %v1449 = vpop.xlane.xlu0 %1448
        %v1450 = vadd.f32 %v1441, %v1442
        %1451 = vadd.xlane.f32.xlu0 %v1450
        %v1452 = vpop.xlane.xlu0 %1451
        %v1453 = vadd.f32 %v1443, %v1444
        %1454 = vadd.xlane.f32.xlu0 %v1453
        %v1455 = vpop.xlane.xlu0 %1454
        %v1456 = vadd.f32 %v1445, %v1446
        %1457 = vadd.xlane.f32.xlu0 %v1456
        %v1458 = vpop.xlane.xlu0 %1457
        %v1459 = vmul.f32 %v1449, %v1031
        %v1460 = vmul.f32 %v1452, %v1031
        %v1461 = vmul.f32 %v1455, %v1031
        %v1462 = vmul.f32 %v1458, %v1031
        %v1463 = vadd.f32 %v1459, 1e-05
        %v1464 = vadd.f32 %v1460, 1e-05
        %v1465 = vadd.f32 %v1461, 1e-05
        %v1466 = vadd.f32 %v1462, 1e-05
        %v1467 = vrsqrt.pop %v1463
        %v1468 = vrsqrt.pop %v1464
        %v1469 = vrsqrt.pop %v1465
        %v1470 = vrsqrt.pop %v1466
        %v1471 = vmul.f32 %v1431, %v1467
        %v1472 = vmul.f32 %v1432, %v1467
        %v1473 = vmul.f32 %v1433, %v1468
        %v1474 = vmul.f32 %v1434, %v1468
        %v1475 = vmul.f32 %v1435, %v1469
        %v1476 = vmul.f32 %v1436, %v1469
        %v1477 = vmul.f32 %v1437, %v1470
        %v1478 = vmul.f32 %v1438, %v1470
        %v1479 = vld [vmem:[%s18] sm:$0xff]
        %v1480 = vld [vmem:[%s18 + $0x8] sm:$0xff]
        %v1481 = vld [vmem:[%s18 + $0x10] sm:$0xff]
        %v1482 = vld [vmem:[%s18 + $0x18] sm:$0xff]
        %1484 = vset.pattern.permute.xlu0 0
        %1485 = vperm.xlu0 %1484, %v1479
        %v1486 = vpop.permute.xlu0 %1485
        %1489 = vset.pattern.permute.xlu0 0
        %1490 = vperm.xlu0 %1489, %v1480
        %v1491 = vpop.permute.xlu0 %1490
        %1494 = vset.pattern.permute.xlu0 0
        %1495 = vperm.xlu0 %1494, %v1481
        %v1496 = vpop.permute.xlu0 %1495
        %1499 = vset.pattern.permute.xlu0 0
        %1500 = vperm.xlu0 %1499, %v1482
        %v1501 = vpop.permute.xlu0 %1500
        %v1503 = vmul.f32 %v1471, %v1486
        %v1504 = vmul.f32 %v1472, %v1486
        %v1505 = vmul.f32 %v1473, %v1491
        %v1506 = vmul.f32 %v1474, %v1491
        %v1507 = vmul.f32 %v1475, %v1496
        %v1508 = vmul.f32 %v1476, %v1496
        %v1509 = vmul.f32 %v1477, %v1501
        %v1510 = vmul.f32 %v1478, %v1501
        %v1511 = vld [vmem:[%s19] sm:$0xff]
        %v1512 = vld [vmem:[%s19 + $0x8] sm:$0xff]
        %v1513 = vld [vmem:[%s19 + $0x10] sm:$0xff]
        %v1514 = vld [vmem:[%s19 + $0x18] sm:$0xff]
        %1516 = vset.pattern.permute.xlu0 0
        %1517 = vperm.xlu0 %1516, %v1511
        %v1518 = vpop.permute.xlu0 %1517
        %1521 = vset.pattern.permute.xlu0 0
        %1522 = vperm.xlu0 %1521, %v1512
        %v1523 = vpop.permute.xlu0 %1522
        %1526 = vset.pattern.permute.xlu0 0
        %1527 = vperm.xlu0 %1526, %v1513
        %v1528 = vpop.permute.xlu0 %1527
        %1531 = vset.pattern.permute.xlu0 0
        %1532 = vperm.xlu0 %1531, %v1514
        %v1533 = vpop.permute.xlu0 %1532
        %v1535 = vadd.f32 %v1503, %v1518
        %v1536 = vadd.f32 %v1504, %v1518
        %v1537 = vadd.f32 %v1505, %v1523
        %v1538 = vadd.f32 %v1506, %v1523
        %v1539 = vadd.f32 %v1507, %v1528
        %v1540 = vadd.f32 %v1508, %v1528
        %v1541 = vadd.f32 %v1509, %v1533
        %v1542 = vadd.f32 %v1510, %v1533
        %v1543 = vld [vmem:[%s12] sm:$0xff]
        %v1544 = vld [vmem:[%s12 + $0x8] sm:$0xff]
        %v1545 = vld [vmem:[%s12 + $0x10] sm:$0xff]
        %v1546 = vld [vmem:[%s12 + $0x18] sm:$0xff]
        %v1547 = vld [vmem:[%s12 + $0x20] sm:$0xff]
        %v1548 = vld [vmem:[%s12 + $0x28] sm:$0xff]
        %v1549 = vld [vmem:[%s12 + $0x30] sm:$0xff]
        %v1550 = vld [vmem:[%s12 + $0x38] sm:$0xff]
        %v1551 = vxor.u32 %v730, 2147483648
        %v1552 = vxor.u32 %v731, 2147483648
        %v1553 = vxor.u32 %v732, 2147483648
        %v1554 = vxor.u32 %v733, 2147483648
        %v1555 = vmul.f32 %v1551, 1.442695
        %v1556 = vpow.pop %v1555
        %v1557 = vmul.f32 %v1552, 1.442695
        %v1558 = vpow.pop %v1557
        %v1559 = vmul.f32 %v1553, 1.442695
        %v1560 = vpow.pop %v1559
        %v1561 = vmul.f32 %v1554, 1.442695
        %v1562 = vpow.pop %v1561
        %v1563 = vadd.f32 %v1556, 1.0
        %v1564 = vadd.f32 %v1558, 1.0
        %v1565 = vadd.f32 %v1560, 1.0
        %v1566 = vadd.f32 %v1562, 1.0
        %v1567 = vrcp.pop %v1563
        %v1568 = vmul.f32 1.0, %v1567
        %v1569 = vrcp.pop %v1564
        %v1570 = vmul.f32 1.0, %v1569
        %v1571 = vrcp.pop %v1565
        %v1572 = vmul.f32 1.0, %v1571
        %v1573 = vrcp.pop %v1566
        %v1574 = vmul.f32 1.0, %v1573
        %v1575 = vmul.f32 %v730, %v1568
        %v1576 = vmul.f32 %v731, %v1570
        %v1577 = vmul.f32 %v732, %v1572
        %v1578 = vmul.f32 %v733, %v1574
        %v1579 = vld [vmem:[%s13] sm:$0xff]
        %v1580 = vld [vmem:[%s13 + $0x8] sm:$0xff]
        %v1581 = vld [vmem:[%s13 + $0x10] sm:$0xff]
        %v1582 = vld [vmem:[%s13 + $0x18] sm:$0xff]
        %v1583 = vld [vmem:[%s13 + $0x20] sm:$0xff]
        %v1584 = vld [vmem:[%s13 + $0x28] sm:$0xff]
        %v1585 = vld [vmem:[%s13 + $0x30] sm:$0xff]
        %v1586 = vld [vmem:[%s13 + $0x38] sm:$0xff]
        %1588 = vset.pattern.permute.xlu0 0
        %1589 = vperm.xlu0 %1588, %v1579
        %v1590 = vpop.permute.xlu0 %1589
        %1593 = vset.pattern.permute.xlu0 0
        %1594 = vperm.xlu0 %1593, %v1580
        %v1595 = vpop.permute.xlu0 %1594
        %1598 = vset.pattern.permute.xlu0 0
        %1599 = vperm.xlu0 %1598, %v1581
        %v1600 = vpop.permute.xlu0 %1599
        %1603 = vset.pattern.permute.xlu0 0
        %1604 = vperm.xlu0 %1603, %v1582
        %v1605 = vpop.permute.xlu0 %1604
        %1608 = vset.pattern.permute.xlu0 0
        %1609 = vperm.xlu0 %1608, %v1583
        %v1610 = vpop.permute.xlu0 %1609
        %1613 = vset.pattern.permute.xlu0 0
        %1614 = vperm.xlu0 %1613, %v1584
        %v1615 = vpop.permute.xlu0 %1614
        %1618 = vset.pattern.permute.xlu0 0
        %1619 = vperm.xlu0 %1618, %v1585
        %v1620 = vpop.permute.xlu0 %1619
        %1623 = vset.pattern.permute.xlu0 0
        %1624 = vperm.xlu0 %1623, %v1586
        %v1625 = vpop.permute.xlu0 %1624
        %v1628 = vsel %vm744, %v1543, 0
        %v1631 = vsel %vm744, %v1544, 0
        %v1634 = vsel %vm744, %v1545, 0
        %v1637 = vsel %vm744, %v1546, 0
        %v1640 = vsel %vm744, %v1547, 0
        %v1643 = vsel %vm744, %v1548, 0
        %v1646 = vsel %vm744, %v1549, 0
        %v1649 = vsel %vm744, %v1550, 0
        %1651 = vmatprep.subr.mxu0 %v1576
        %1652 = vmatpush1.msra.mxu0 %v1575
        %1653 = vmatprep.subr.mxu0 %v1578
        %1654 = vmatpush1.msra.mxu0 %v1577
        %1655 = vmatprep.subr.mxu0 0.0
        %1656 = vmatpush1.msra.mxu0 0.0
        %1657 = vmatprep.subr.mxu0 0.0
        %1658 = vmatpush1.msra.mxu0 0.0
        %1659 = vmatprep.subr.mxu0 0.0
        %1660 = vmatpush1.msra.mxu0 0.0
        %1661 = vmatprep.subr.mxu0 0.0
        %1662 = vmatpush1.msra.mxu0 0.0
        %1663 = vmatprep.subr.mxu0 0.0
        %1664 = vmatpush1.msra.mxu0 0.0
        %1665 = vmatprep.subr.mxu0 0.0
        %1666 = vmatpush1.msra.mxu0 0.0
        %1667 = vmatprep.subr.mxu0 0.0
        %1668 = vmatpush1.msra.mxu0 0.0
        %1669 = vmatprep.subr.mxu0 0.0
        %1670 = vmatpush1.msra.mxu0 0.0
        %1671 = vmatprep.subr.mxu0 0.0
        %1672 = vmatpush1.msra.mxu0 0.0
        %1673 = vmatprep.subr.mxu0 0.0
        %1674 = vmatpush1.msra.mxu0 0.0
        %1675 = vmatprep.subr.mxu0 0.0
        %1676 = vmatpush1.msra.mxu0 0.0
        %1677 = vmatprep.subr.mxu0 0.0
        %1678 = vmatpush1.msra.mxu0 0.0
        %1679 = vmatprep.subr.mxu0 0.0
        %1680 = vmatpush1.msra.mxu0 0.0
        %1681 = vmatprep.subr.mxu0 0.0
        %1682 = vmatpush1.msra.mxu0 0.0
        %1683 = vmatprep.subr.mxu0 0.0
        %1684 = vmatpush1.msra.mxu0 0.0
        %1685 = vmatprep.subr.mxu0 0.0
        %1686 = vmatpush1.msra.mxu0 0.0
        %1687 = vmatprep.subr.mxu0 0.0
        %1688 = vmatpush1.msra.mxu0 0.0
        %1689 = vmatprep.subr.mxu0 0.0
        %1690 = vmatpush1.msra.mxu0 0.0
        %1691 = vmatprep.subr.mxu0 0.0
        %1692 = vmatpush1.msra.mxu0 0.0
        %1693 = vmatprep.subr.mxu0 0.0
        %1694 = vmatpush1.msra.mxu0 0.0
        %1695 = vmatprep.subr.mxu0 0.0
        %1696 = vmatpush1.msra.mxu0 0.0
        %1697 = vmatprep.subr.mxu0 0.0
        %1698 = vmatpush1.msra.mxu0 0.0
        %1699 = vmatprep.subr.mxu0 0.0
        %1700 = vmatpush1.msra.mxu0 0.0
        %1701 = vmatprep.subr.mxu0 0.0
        %1702 = vmatpush1.msra.mxu0 0.0
        %1703 = vmatprep.subr.mxu0 0.0
        %1704 = vmatpush1.msra.mxu0 0.0
        %1705 = vmatprep.subr.mxu0 0.0
        %1706 = vmatpush1.msra.mxu0 0.0
        %1707 = vmatprep.subr.mxu0 0.0
        %1708 = vmatpush1.msra.mxu0 0.0
        %1709 = vmatprep.subr.mxu0 0.0
        %1710 = vmatpush1.msra.mxu0 0.0
        %1711 = vmatprep.subr.mxu0 0.0
        %1712 = vmatpush1.msra.mxu0 0.0
        %1713 = vmatprep.subr.mxu0 0.0
        %1714 = vmatpush1.msra.mxu0 0.0
        %1715 = vmatprep.mubr.f32.mxu0 0.0
        %1716 = vmatmul.mubr.f32.gmra.mrb[0].mxu0 %v1628
        %v1717 = vpop.f32.mrb[0].mxu0
        %v1718 = vadd.f32 %v1590, %v1717
        %v1719 = vpop.f32.mrb[0].mxu0
        %v1720 = vadd.f32 %v1590, %v1719
        %1721 = vmatprep.mubr.f32.mxu0 0.0
        %1722 = vmatmul.mubr.f32.gmra.mrb[0].mxu0 %v1631
        %v1723 = vpop.f32.mrb[0].mxu0
        %v1724 = vadd.f32 %v1595, %v1723
        %v1725 = vpop.f32.mrb[0].mxu0
        %v1726 = vadd.f32 %v1595, %v1725
        %1727 = vmatprep.mubr.f32.mxu0 0.0
        %1728 = vmatmul.mubr.f32.gmra.mrb[0].mxu0 %v1634
        %v1729 = vpop.f32.mrb[0].mxu0
        %v1730 = vadd.f32 %v1600, %v1729
        %v1731 = vpop.f32.mrb[0].mxu0
        %v1732 = vadd.f32 %v1600, %v1731
        %1733 = vmatprep.mubr.f32.mxu0 0.0
        %1734 = vmatmul.mubr.f32.gmra.mrb[0].mxu0 %v1637
        %v1735 = vpop.f32.mrb[0].mxu0
        %v1736 = vadd.f32 %v1605, %v1735
        %v1737 = vpop.f32.mrb[0].mxu0
        %v1738 = vadd.f32 %v1605, %v1737
        %1739 = vmatprep.mubr.f32.mxu0 0.0
        %1740 = vmatmul.mubr.f32.gmra.mrb[0].mxu0 %v1640
        %v1741 = vpop.f32.mrb[0].mxu0
        %v1742 = vadd.f32 %v1610, %v1741
        %v1743 = vpop.f32.mrb[0].mxu0
        %v1744 = vadd.f32 %v1610, %v1743
        %1745 = vmatprep.mubr.f32.mxu0 0.0
        %1746 = vmatmul.mubr.f32.gmra.mrb[0].mxu0 %v1643
        %v1747 = vpop.f32.mrb[0].mxu0
        %v1748 = vadd.f32 %v1615, %v1747
        %v1749 = vpop.f32.mrb[0].mxu0
        %v1750 = vadd.f32 %v1615, %v1749
        %1751 = vmatprep.mubr.f32.mxu0 0.0
        %1752 = vmatmul.mubr.f32.gmra.mrb[0].mxu0 %v1646
        %v1753 = vpop.f32.mrb[0].mxu0
        %v1754 = vadd.f32 %v1620, %v1753
        %v1755 = vpop.f32.mrb[0].mxu0
        %v1756 = vadd.f32 %v1620, %v1755
        %1757 = vmatprep.mubr.f32.mxu0 0.0
        %1758 = vmatmul.mubr.f32.gmra.mrb[0].mxu0 %v1649
        %v1759 = vpop.f32.mrb[0].mxu0
        %v1760 = vadd.f32 %v1625, %v1759
        %v1761 = vpop.f32.mrb[0].mxu0
        %v1762 = vadd.f32 %v1625, %v1761
        %1763 = vdwg.mxu0
        %v1764 = vadd.f32 %v1742, 1.0
        %v1765 = vadd.f32 %v1744, 1.0
        %v1766 = vadd.f32 %v1748, 1.0
        %v1767 = vadd.f32 %v1750, 1.0
        %v1768 = vadd.f32 %v1754, 1.0
        %v1769 = vadd.f32 %v1756, 1.0
        %v1770 = vadd.f32 %v1760, 1.0
        %v1771 = vadd.f32 %v1762, 1.0
        %v1772 = vmul.f32 %v1535, %v1764
        %v1773 = vmul.f32 %v1536, %v1765
        %v1774 = vmul.f32 %v1537, %v1766
        %v1775 = vmul.f32 %v1538, %v1767
        %v1776 = vmul.f32 %v1539, %v1768
        %v1777 = vmul.f32 %v1540, %v1769
        %v1778 = vmul.f32 %v1541, %v1770
        %v1779 = vmul.f32 %v1542, %v1771
        %v1780 = vadd.f32 %v1772, %v1718
        %v1781 = vadd.f32 %v1773, %v1720
        %v1782 = vadd.f32 %v1774, %v1724
        %v1783 = vadd.f32 %v1775, %v1726
        %v1784 = vadd.f32 %v1776, %v1730
        %v1785 = vadd.f32 %v1777, %v1732
        %v1786 = vadd.f32 %v1778, %v1736
        %v1787 = vadd.f32 %v1779, %v1738
        %v1788 = vxor.u32 %v1780, 2147483648
        %v1789 = vxor.u32 %v1781, 2147483648
        %v1790 = vxor.u32 %v1782, 2147483648
        %v1791 = vxor.u32 %v1783, 2147483648
        %v1792 = vmul.f32 %v1788, 1.442695
        %v1793 = vpow.pop %v1792
        %v1794 = vmul.f32 %v1789, 1.442695
        %v1795 = vpow.pop %v1794
        %v1796 = vmul.f32 %v1790, 1.442695
        %v1797 = vpow.pop %v1796
        %v1798 = vmul.f32 %v1791, 1.442695
        %v1799 = vpow.pop %v1798
        %v1800 = vadd.f32 %v1793, 1.0
        %v1801 = vadd.f32 %v1795, 1.0
        %v1802 = vadd.f32 %v1797, 1.0
        %v1803 = vadd.f32 %v1799, 1.0
        %v1804 = vrcp.pop %v1800
        %v1805 = vmul.f32 1.0, %v1804
        %v1806 = vrcp.pop %v1801
        %v1807 = vmul.f32 1.0, %v1806
        %v1808 = vrcp.pop %v1802
        %v1809 = vmul.f32 1.0, %v1808
        %v1810 = vrcp.pop %v1803
        %v1811 = vmul.f32 1.0, %v1810
        %v1812 = vtanh.pop %v1784
        %v1813 = vtanh.pop %v1785
        %v1814 = vtanh.pop %v1786
        %v1815 = vtanh.pop %v1787
        %v1816 = vmul.f32 %v1805, %v1812
        %v1817 = vmul.f32 %v1807, %v1813
        %v1818 = vmul.f32 %v1809, %v1814
        %v1819 = vmul.f32 %v1811, %v1815
        %v1820 = vld [vmem:[%s14] sm:$0xff]
        %v1821 = vld [vmem:[%s14 + $0x8] sm:$0xff]
        %v1822 = vld [vmem:[%s14 + $0x10] sm:$0xff]
        %v1823 = vld [vmem:[%s14 + $0x18] sm:$0xff]
        %v1824 = vld [vmem:[%s15] sm:$0xff]
        %v1825 = vld [vmem:[%s15 + $0x8] sm:$0xff]
        %v1826 = vld [vmem:[%s15 + $0x10] sm:$0xff]
        %v1827 = vld [vmem:[%s15 + $0x18] sm:$0xff]
        %1829 = vset.pattern.permute.xlu0 0
        %1830 = vperm.xlu0 %1829, %v1824
        %v1831 = vpop.permute.xlu0 %1830
        %1834 = vset.pattern.permute.xlu0 0
        %1835 = vperm.xlu0 %1834, %v1825
        %v1836 = vpop.permute.xlu0 %1835
        %1839 = vset.pattern.permute.xlu0 0
        %1840 = vperm.xlu0 %1839, %v1826
        %v1841 = vpop.permute.xlu0 %1840
        %1844 = vset.pattern.permute.xlu0 0
        %1845 = vperm.xlu0 %1844, %v1827
        %v1846 = vpop.permute.xlu0 %1845
        %v1849 = vsel %vm744, %v1820, 0
        %v1852 = vsel %vm744, %v1821, 0
        %v1855 = vsel %vm744, %v1822, 0
        %v1858 = vsel %vm744, %v1823, 0
        %1860 = vmatprep.subr.mxu0 %v1817
        %1861 = vmatpush1.msra.mxu0 %v1816
        %1862 = vmatprep.subr.mxu0 %v1819
        %1863 = vmatpush1.msra.mxu0 %v1818
        %1864 = vmatprep.subr.mxu0 0.0
        %1865 = vmatpush1.msra.mxu0 0.0
        %1866 = vmatprep.subr.mxu0 0.0
        %1867 = vmatpush1.msra.mxu0 0.0
        %1868 = vmatprep.subr.mxu0 0.0
        %1869 = vmatpush1.msra.mxu0 0.0
        %1870 = vmatprep.subr.mxu0 0.0
        %1871 = vmatpush1.msra.mxu0 0.0
        %1872 = vmatprep.subr.mxu0 0.0
        %1873 = vmatpush1.msra.mxu0 0.0
        %1874 = vmatprep.subr.mxu0 0.0
        %1875 = vmatpush1.msra.mxu0 0.0
        %1876 = vmatprep.subr.mxu0 0.0
        %1877 = vmatpush1.msra.mxu0 0.0
        %1878 = vmatprep.subr.mxu0 0.0
        %1879 = vmatpush1.msra.mxu0 0.0
        %1880 = vmatprep.subr.mxu0 0.0
        %1881 = vmatpush1.msra.mxu0 0.0
        %1882 = vmatprep.subr.mxu0 0.0
        %1883 = vmatpush1.msra.mxu0 0.0
        %1884 = vmatprep.subr.mxu0 0.0
        %1885 = vmatpush1.msra.mxu0 0.0
        %1886 = vmatprep.subr.mxu0 0.0
        %1887 = vmatpush1.msra.mxu0 0.0
        %1888 = vmatprep.subr.mxu0 0.0
        %1889 = vmatpush1.msra.mxu0 0.0
        %1890 = vmatprep.subr.mxu0 0.0
        %1891 = vmatpush1.msra.mxu0 0.0
        %1892 = vmatprep.subr.mxu0 0.0
        %1893 = vmatpush1.msra.mxu0 0.0
        %1894 = vmatprep.subr.mxu0 0.0
        %1895 = vmatpush1.msra.mxu0 0.0
        %1896 = vmatprep.subr.mxu0 0.0
        %1897 = vmatpush1.msra.mxu0 0.0
        %1898 = vmatprep.subr.mxu0 0.0
        %1899 = vmatpush1.msra.mxu0 0.0
        %1900 = vmatprep.subr.mxu0 0.0
        %1901 = vmatpush1.msra.mxu0 0.0
        %1902 = vmatprep.subr.mxu0 0.0
        %1903 = vmatpush1.msra.mxu0 0.0
        %1904 = vmatprep.subr.mxu0 0.0
        %1905 = vmatpush1.msra.mxu0 0.0
        %1906 = vmatprep.subr.mxu0 0.0
        %1907 = vmatpush1.msra.mxu0 0.0
        %1908 = vmatprep.subr.mxu0 0.0
        %1909 = vmatpush1.msra.mxu0 0.0
        %1910 = vmatprep.subr.mxu0 0.0
        %1911 = vmatpush1.msra.mxu0 0.0
        %1912 = vmatprep.subr.mxu0 0.0
        %1913 = vmatpush1.msra.mxu0 0.0
        %1914 = vmatprep.subr.mxu0 0.0
        %1915 = vmatpush1.msra.mxu0 0.0
        %1916 = vmatprep.subr.mxu0 0.0
        %1917 = vmatpush1.msra.mxu0 0.0
        %1918 = vmatprep.subr.mxu0 0.0
        %1919 = vmatpush1.msra.mxu0 0.0
        %1920 = vmatprep.subr.mxu0 0.0
        %1921 = vmatpush1.msra.mxu0 0.0
        %1922 = vmatprep.subr.mxu0 0.0
        %1923 = vmatpush1.msra.mxu0 0.0
        %1924 = vmatprep.mubr.f32.mxu0 0.0
        %1925 = vmatmul.mubr.f32.gmra.mrb[0].mxu0 %v1849
        %v1926 = vpop.f32.mrb[0].mxu0
        %v1927 = vadd.f32 %v1831, %v1926
        %v1928 = vpop.f32.mrb[0].mxu0
        %v1929 = vadd.f32 %v1831, %v1928
        %1930 = vmatprep.mubr.f32.mxu0 0.0
        %1931 = vmatmul.mubr.f32.gmra.mrb[0].mxu0 %v1852
        %v1932 = vpop.f32.mrb[0].mxu0
        %v1933 = vadd.f32 %v1836, %v1932
        %v1934 = vpop.f32.mrb[0].mxu0
        %v1935 = vadd.f32 %v1836, %v1934
        %1936 = vmatprep.mubr.f32.mxu0 0.0
        %1937 = vmatmul.mubr.f32.gmra.mrb[0].mxu0 %v1855
        %v1938 = vpop.f32.mrb[0].mxu0
        %v1939 = vadd.f32 %v1841, %v1938
        %v1940 = vpop.f32.mrb[0].mxu0
        %v1941 = vadd.f32 %v1841, %v1940
        %1942 = vmatprep.mubr.f32.mxu0 0.0
        %1943 = vmatmul.mubr.f32.gmra.mrb[0].mxu0 %v1858
        %v1944 = vpop.f32.mrb[0].mxu0
        %v1945 = vadd.f32 %v1846, %v1944
        %v1946 = vpop.f32.mrb[0].mxu0
        %v1947 = vadd.f32 %v1846, %v1946
        %1948 = vdwg.mxu0
        %v1949 = vadd.f32 %v726, %v1927
        %v1950 = vadd.f32 %v727, %v1929
        %v1951 = vadd.f32 %v728, %v1933
        %v1952 = vadd.f32 %v729, %v1935
        %v1953 = vmul.f32 %v1949, 0.70710677
        %v1954 = vmul.f32 %v1950, 0.70710677
        %v1955 = vmul.f32 %v1951, 0.70710677
        %v1956 = vmul.f32 %v1952, 0.70710677
        %1957 = vst [vmem:[%s698] sm:$0xff] %v1953
        %1958 = vst [vmem:[%s698 + $0x8] sm:$0xff] %v1954
        %1959 = vst [vmem:[%s698 + $0x10] sm:$0xff] %v1955
        %1960 = vst [vmem:[%s698 + $0x18] sm:$0xff] %v1956
        %1961 = vst [vmem:[%s705] sm:$0xff] %v1939
        %1962 = vst [vmem:[%s705 + $0x8] sm:$0xff] %v1941
        %1963 = vst [vmem:[%s705 + $0x10] sm:$0xff] %v1945
        %1964 = vst [vmem:[%s705 + $0x18] sm:$0xff] %v1947
        %s1965 = sand.u32 %s487, 1
        %s1966 = scalar_lea.sflag [#allocation3], %s1965
        %s1967 = sand.u32 %s487, 1
        %s1968 = smul.addr %s1967, 32
        %s1969 = scalar_lea.vmem [#allocation2], %s1968
        %s1970 = sand.u32 %s513, 1
        %s1971 = scalar_lea.sflag [#allocation5], %s1970
        %s1972 = sand.u32 %s513, 1
        %s1973 = smul.addr %s1972, 32
        %s1974 = scalar_lea.vmem [#allocation4], %s1973
        // Predicated region
        $region101: #{tpu_custom_call.1} parent=99 // pred_check
          %p1975 = pneg %p497
        $region102: #{tpu_custom_call.1} parent=99 // pred_check_branch
          %1977 = sbr.rel (%p1975) target = $region104
        $region103: #{tpu_custom_call.1} parent=99 // pred_region
          %s1979 = ssub.s32 512, 512
          %1980 = vsyncadd %s1966, %s1979
          %s1981 = smul.addr %s39, 4
          %s1982 = smul.addr %s1981, 128
          %s1983 = scalar_lea.hbm %s20, %s1982
          %s1984 = sshll.u32 %s1969, 4
          %s1985 = int_to_ptr.vmem [resolvable:$true] %s1984
          %1990 = dma.vmem_to_hbm [thread:$0]  %s1985, 512, %s1983, %s1966, 256, 256, 16
        $region104: #{tpu_custom_call.1} parent=99 // pred_fallthru
          _
        // Predicated region
        $region105: #{tpu_custom_call.1} parent=99 // pred_check
          %p1991 = pneg %p523
        $region106: #{tpu_custom_call.1} parent=99 // pred_check_branch
          %1993 = sbr.rel (%p1991) target = $region108
        $region107: #{tpu_custom_call.1} parent=99 // pred_region
          %s1995 = ssub.s32 512, 512
          %1996 = vsyncadd %s1971, %s1995
          %s1997 = smul.addr %s39, 4
          %s1998 = smul.addr %s1997, 128
          %s1999 = scalar_lea.hbm %s21, %s1998
          %s2000 = sshll.u32 %s1974, 4
          %s2001 = int_to_ptr.vmem [resolvable:$true] %s2000
          %2006 = dma.vmem_to_hbm [thread:$0]  %s2001, 512, %s1999, %s1971, 256, 256, 16
        $region108: #{tpu_custom_call.1} parent=99 // pred_fallthru
          _
      $region100: #{tpu_custom_call.1} parent=5 // pred_fallthru
        _
      %p2007 = scmp.le.s32.totalorder 2, %s34
      // Predicated region
      $region109: #{tpu_custom_call.1} parent=5 // pred_check
        %p2008 = pneg %p2007
      $region110: #{tpu_custom_call.1} parent=5 // pred_check_branch
        %2010 = sbr.rel (%p2008) target = $region112
      $region111: #{tpu_custom_call.1} parent=5 // pred_region
        %s2011 = ssub.s32 %s34, 2
        // Predicated region
        $region113: #{tpu_custom_call.1} parent=111 // pred_check
          %p2012 = pneg %p503
        $region114: #{tpu_custom_call.1} parent=111 // pred_check_branch
          %2014 = sbr.rel (%p2012) target = $region116
        $region115: #{tpu_custom_call.1} parent=111 // pred_region
          %s2015 = sand.u32 %s488, 1
          %s2016 = scalar_lea.sflag [#allocation3], %s2015
          %s2017 = sand.u32 %s488, 1
          %s2018 = smul.addr %s2017, 32
          %s2019 = scalar_lea.vmem [#allocation2], %s2018
          %2020 = dma.done %s2016, 512
        $region116: #{tpu_custom_call.1} parent=111 // pred_fallthru
          _
        // Predicated region
        $region117: #{tpu_custom_call.1} parent=111 // pred_check
          %p2021 = pneg %p529
        $region118: #{tpu_custom_call.1} parent=111 // pred_check_branch
          %2023 = sbr.rel (%p2021) target = $region120
        $region119: #{tpu_custom_call.1} parent=111 // pred_region
          %s2024 = sand.u32 %s514, 1
          %s2025 = scalar_lea.sflag [#allocation5], %s2024
          %s2026 = sand.u32 %s514, 1
          %s2027 = smul.addr %s2026, 32
          %s2028 = scalar_lea.vmem [#allocation4], %s2027
          %2029 = dma.done %s2025, 512
        $region120: #{tpu_custom_call.1} parent=111 // pred_fallthru
          _
      $region112: #{tpu_custom_call.1} parent=5 // pred_fallthru
        _
    $region6: #{tpu_custom_call.1} parent=1 // loop_footer
      %s38 = sadd.s32 1, %s34
    $region7: #{tpu_custom_call.1} parent=1 // loop_footer_branch
      %33 = sbr.rel target = $region3
    $region8: #{tpu_custom_call.1} parent=1 // loop_exit
      _
    %2030 = vsyncpa [#allocation3], 1
    %s2031 = scalar_lea.sflag [#allocation3], 1
    %2032 = vsyncpa %s2031, 1
    %2033 = vsyncpa [#allocation5], 1
    %s2034 = scalar_lea.sflag [#allocation5], 1
    %2035 = vsyncpa %s2034, 1

</llo_original>
